<compile_context>
chip_gen: v5e
topology: v5e:2x2
jax: 0.10.0
libtpu: 0.0.40
codegen_flags: <defaults>
</compile_context>

<pallas_src>
import jax
import jax.numpy as jnp
from jax.experimental import pallas as pl
from jax.experimental.pallas import tpu as pltpu


# ----------------------------- helpers -----------------------------

def _round_up(n, m):
    return ((n + m - 1) // m) * m


def _tile_and_pad(n, max_tile=512, min_tiles=1):
    """Pick a row tile (multiple of 128, <= max_tile) and the padded extent it divides.

    Prefers (in order): meeting `min_tiles` (so a "parallel" grid axis can shard across v7x's
    2 TensorCores), least padding, then the largest tile (fewest grid steps).
    """
    max_tile = max(128, max_tile)
    p = _round_up(max(n, 1), 128)
    best = None
    for tile in range(128, min(max_tile, p) + 1, 128):
        padded = _round_up(p, tile)
        ntiles = padded // tile
        key = (ntiles < min_tiles, padded, -tile)
        if best is None or key < best[0]:
            best = (key, tile, padded)
    return best[1], best[2]


def _pad2d(x, rows, cols):
    return jnp.pad(x, ((0, rows - x.shape[0]), (0, cols - x.shape[1])))


def _conv_vmem_bytes(t_dst, t_src, n_src_p, f_src, f_dst, f_out,
                     resident_src, fuse_fc, out_itemsize):
    """Rough per-call VMEM footprint of the tiled graphconv kernel (bytes)."""
    b = 2 * t_dst * t_src * 2                          # A tile, bf16, double-buffered
    b += (n_src_p * f_src * 2 if resident_src          # resident X/h1: single copy
          else 2 * t_src * f_src * 2)                  # tiled fallback: double-buffered
    b += f_src * f_dst * 2 + f_dst * 4                 # W (bf16) + bias (f32), single-buffered
    if fuse_fc:
        b += f_dst * f_out * 2 + f_out * 4              # Wfc + bfc
    b += 2 * t_dst * f_out * out_itemsize               # output tile, double-buffered
    b += t_dst * f_src * 4                               # f32 aggregation accumulator
    return b


# ----------------------------- kernels -----------------------------

def _make_conv_kernel(src_tile, resident_src, fuse_fc):
    """Graphconv kernel over grid = (dst_row_tiles, src_reduction_tiles).

    Computes one dst-row tile of sigmoid(A @ X @ W + b) and, if fuse_fc, additionally applies
    the final Linear (@ Wfc + bfc) while the tile is still in VMEM.
    """

    def kernel(a_ref, x_ref, w_ref, b_ref, *rest):
        if fuse_fc:
            wf_ref, bf_ref, o_ref, acc_ref = rest
        else:
            o_ref, acc_ref = rest
        k = pl.program_id(1)

        @pl.when(k == 0)
        def _():
            acc_ref[...] = jnp.zeros_like(acc_ref)

        if resident_src:
            # x_ref holds the whole (padded) source-feature matrix in VMEM; slice this k-chunk.
            start = pl.multiple_of(k * src_tile, src_tile)
            x_blk = x_ref[pl.ds(start, src_tile), :]
        else:
            x_blk = x_ref[...]

        # aggregate-first: acc += A_tile @ X_chunk (bf16 operands, f32 MXU accumulation)
        acc_ref[...] += jnp.dot(a_ref[...], x_blk, preferred_element_type=jnp.float32)

        @pl.when(k == pl.num_programs(1) - 1)
        def _():
            agg = acc_ref[...].astype(jnp.bfloat16)
            h = jnp.dot(agg, w_ref[...], preferred_element_type=jnp.float32) + b_ref[...]
            h = jax.nn.sigmoid(h)
            if fuse_fc:
                h = h.astype(jnp.bfloat16)
                o = jnp.dot(h, wf_ref[...], preferred_element_type=jnp.float32) + bf_ref[...]
                o_ref[...] = o.astype(o_ref.dtype)
            else:
                o_ref[...] = h.astype(o_ref.dtype)

    return kernel


def _gcn_fused_kernel(a1_ref, x_ref, w1_ref, b1_ref, a2_ref, w2_ref, b2_ref,
                      wf_ref, bf_ref, o_ref):
    """Whole-model fast path: conv1 + conv2 + fc in one kernel (everything resident in VMEM)."""
    agg1 = jnp.dot(a1_ref[...], x_ref[...], preferred_element_type=jnp.float32)
    h1 = jax.nn.sigmoid(
        jnp.dot(agg1.astype(jnp.bfloat16), w1_ref[...], preferred_element_type=jnp.float32)
        + b1_ref[...]).astype(jnp.bfloat16)
    agg2 = jnp.dot(a2_ref[...], h1, preferred_element_type=jnp.float32)
    h2 = jax.nn.sigmoid(
        jnp.dot(agg2.astype(jnp.bfloat16), w2_ref[...], preferred_element_type=jnp.float32)
        + b2_ref[...]).astype(jnp.bfloat16)
    o = jnp.dot(h2, wf_ref[...], preferred_element_type=jnp.float32) + bf_ref[...]
    o_ref[...] = o.astype(o_ref.dtype)


# ----------------------------- tiled pallas_call wrapper -----------------------------

def _graphconv_call(a_p, x_p, w_p, b_p, *, t_dst, t_src, wf_p=None, bf_p=None,
                    out_dtype, flops, transcendentals, vmem_limit):
    n_dst_p, n_src_p = a_p.shape
    f_src = x_p.shape[1]
    f_dst = w_p.shape[1]
    fuse_fc = wf_p is not None
    f_out = wf_p.shape[1] if fuse_fc else f_dst
    out_itemsize = jnp.dtype(out_dtype).itemsize

    # Keep the source-feature matrix resident in VMEM (fetched once) when it fits the budget.
    resident = _conv_vmem_bytes(t_dst, t_src, n_src_p, f_src, f_dst, f_out,
                                True, fuse_fc, out_itemsize) <= int(0.8 * vmem_limit)

    single = pl.Buffered(1)  # constant-index operands never change -> no double buffer
    if resident:
        x_spec = pl.BlockSpec((n_src_p, f_src), lambda i, k: (0, 0), pipeline_mode=single)
    else:
        x_spec = pl.BlockSpec((t_src, f_src), lambda i, k: (k, 0))

    in_specs = [
        pl.BlockSpec((t_dst, t_src), lambda i, k: (i, k)),                        # A tile
        x_spec,                                                                    # X / h1
        pl.BlockSpec((f_src, f_dst), lambda i, k: (0, 0), pipeline_mode=single),   # W
        pl.BlockSpec((1, f_dst), lambda i, k: (0, 0), pipeline_mode=single),       # b
    ]
    args = [a_p, x_p, w_p, b_p]
    if fuse_fc:
        in_specs += [
            pl.BlockSpec((f_dst, f_out), lambda i, k: (0, 0), pipeline_mode=single),  # Wfc
            pl.BlockSpec((1, f_out), lambda i, k: (0, 0), pipeline_mode=single),      # bfc
        ]
        args += [wf_p, bf_p]

    x_stream = x_p.size * 2 if resident else x_p.size * 2 * (n_dst_p // t_dst)
    cost = pl.CostEstimate(
        flops=flops,
        transcendentals=transcendentals,
        bytes_accessed=a_p.size * 2 + x_stream + w_p.size * 2 + b_p.size * 4
        + ((wf_p.size * 2 + bf_p.size * 4) if fuse_fc else 0)
        + n_dst_p * f_out * out_itemsize,
    )

    return pl.pallas_call(
        _make_conv_kernel(t_src, resident, fuse_fc),
        out_shape=jax.ShapeDtypeStruct((n_dst_p, f_out), out_dtype),
        grid_spec=pltpu.PrefetchScalarGridSpec(
            num_scalar_prefetch=0,
            grid=(n_dst_p // t_dst, n_src_p // t_src),
            in_specs=in_specs,
            out_specs=pl.BlockSpec((t_dst, f_out), lambda i, k: (i, 0)),
            scratch_shapes=[pltpu.VMEM((t_dst, f_src), jnp.float32)],
        ),
        compiler_params=pltpu.CompilerParams(
            dimension_semantics=("parallel", "arbitrary"),
            vmem_limit_bytes=vmem_limit,
        ),
        cost_estimate=cost,
    )(*args)


# ----------------------------- full forward -----------------------------

def gcn_forward(a1, a2, x, w1, b1, w2, b2, wfc, bfc, *,
                max_tile=512, vmem_limit_bytes=32 * 1024 * 1024):
    """GCN forward.  a1:[N1,N0], a2:[N2,N1] dense 'both'-normalized block adjacencies.

    max_tile / vmem_limit_bytes are per-generation knobs: v5e/v6e (128 MiB VMEM) can use
    max_tile=1024 and 64 MiB; v7x (64 MiB per TC) should keep these conservative defaults.
    """
    n1, n0 = a1.shape
    n2, _ = a2.shape
    in_feats = x.shape[1]
    hid1 = w1.shape[1]
    hid2 = w2.shape[1]
    out_feats = wfc.shape[1]

    # lane-dense feature dims (multiples of 128) -> unmasked full-lane stores, 128-wide MXU tiles
    f_in = _round_up(in_feats, 128)
    f_h1 = _round_up(hid1, 128)
    f_h2 = _round_up(hid2, 128)
    f_out = _round_up(out_feats, 128)

    # node tiling: dst axes want >=2 tiles for v7x megacore; n1's padding is shared between its
    # conv1-dst and conv2-src roles so h1's layout is consistent across the two calls
    t0, n0p = _tile_and_pad(n0, max_tile, min_tiles=1)
    t1, n1p = _tile_and_pad(n1, max_tile, min_tiles=2)
    t2, n2p = _tile_and_pad(n2, max_tile, min_tiles=2)

    # All padding is zeros (see padding invariant in the header comment).
    a1p = _pad2d(a1, n1p, n0p).astype(jnp.bfloat16)
    a2p = _pad2d(a2, n2p, n1p).astype(jnp.bfloat16)
    xp = _pad2d(x, n0p, f_in).astype(jnp.bfloat16)
    w1p = _pad2d(w1, f_in, f_h1).astype(jnp.bfloat16)
    w2p = _pad2d(w2, f_h1, f_h2).astype(jnp.bfloat16)
    wfp = _pad2d(wfc, f_h2, f_out).astype(jnp.bfloat16)
    b1p = _pad2d(b1.reshape(1, -1), 1, f_h1).astype(jnp.float32)
    b2p = _pad2d(b2.reshape(1, -1), 1, f_h2).astype(jnp.float32)
    bfp = _pad2d(bfc.reshape(1, -1), 1, f_out).astype(jnp.float32)

    # ---------- single-kernel fast path: the whole padded problem fits in VMEM ----------
    fused_vmem = ((a1p.size + xp.size + w1p.size + a2p.size + w2p.size + wfp.size) * 2
                  + (b1p.size + b2p.size + bfp.size) * 4
                  + n2p * f_out * 4
                  + (n1p * f_in + n2p * f_h1) * 4          # f32 aggregation temporaries
                  + (n1p * f_h1 + n2p * f_h2) * 2)         # bf16 h1 / h2 temporaries
    if max(n0p, n1p, n2p) <= max_tile and fused_vmem <= int(0.6 * vmem_limit_bytes):
        cost = pl.CostEstimate(
            flops=2 * (n1 * n0 * in_feats + n1 * in_feats * hid1
                       + n2 * n1 * hid1 + n2 * hid1 * hid2 + n2 * hid2 * out_feats),
            transcendentals=n1 * hid1 + n2 * hid2,
            bytes_accessed=(a1p.size + xp.size + w1p.size + a2p.size + w2p.size + wfp.size) * 2
            + (b1p.size + b2p.size + bfp.size) * 4 + n2p * f_out * 4,
        )
        out_p = pl.pallas_call(
            _gcn_fused_kernel,
            out_shape=jax.ShapeDtypeStruct((n2p, f_out), jnp.float32),
            compiler_params=pltpu.CompilerParams(vmem_limit_bytes=vmem_limit_bytes),
            cost_estimate=cost,
        )(a1p, xp, w1p, b1p, a2p, w2p, b2p, wfp, bfp)
        return out_p[:n2, :out_feats]

    # ---------- tiled path: conv1, then conv2 fused with the fc ----------
    h1 = _graphconv_call(
        a1p, xp, w1p, b1p, t_dst=t1, t_src=t0, out_dtype=jnp.bfloat16,
        flops=2 * (n1 * n0 * in_feats + n1 * in_feats * hid1),
        transcendentals=n1 * hid1, vmem_limit=vmem_limit_bytes)

    out_p = _graphconv_call(
        a2p, h1, w2p, b2p, t_dst=t2, t_src=t1, wf_p=wfp, bf_p=bfp, out_dtype=jnp.float32,
        flops=2 * (n2 * n1 * hid1 + n2 * hid1 * hid2 + n2 * hid2 * out_feats),
        transcendentals=n2 * hid2, vmem_limit=vmem_limit_bytes)

    return out_p[:n2, :out_feats]


# ----------------------------- test harness -----------------------------

def make_normalized_block_adj(key, n_dst, n_src, p=0.5):
    """Dense DGL-style block adjacency with 'both' normalization: D_dst^-1/2 A D_src^-1/2."""
    a = (jax.random.uniform(key, (n_dst, n_src)) < p).astype(jnp.float32)
    deg_dst = jnp.clip(a.sum(axis=1, keepdims=True), 1.0, None)
    deg_src = jnp.clip(a.sum(axis=0, keepdims=True), 1.0, None)
    return a * jax.lax.rsqrt(deg_dst) * jax.lax.rsqrt(deg_src)


def _reference(a1, a2, x, w1, b1, w2, b2, wfc, bfc):
    h = jax.nn.sigmoid(a1 @ (x @ w1) + b1)
    h = jax.nn.sigmoid(a2 @ (h @ w2) + b2)
    return h @ wfc + bfc


if __name__ == "__main__":
    def make_case(key, n0, n1, n2, in_feats, hid1, hid2, out_feats):
        k = jax.random.split(key, 8)
        a1 = make_normalized_block_adj(k[0], n1, n0)
        a2 = make_normalized_block_adj(k[1], n2, n1)
        x = jax.random.normal(k[2], (n0, in_feats), dtype=jnp.float32)
        w1 = jax.random.normal(k[3], (in_feats, hid1), dtype=jnp.float32) / jnp.sqrt(in_feats)
        b1 = jax.random.normal(k[4], (1, hid1), dtype=jnp.float32) * 0.1
        w2 = jax.random.normal(k[5], (hid1, hid2), dtype=jnp.float32) / jnp.sqrt(hid1)
        b2 = jnp.zeros((1, hid2), dtype=jnp.float32)
        wfc = jax.random.normal(k[6], (hid2, out_feats), dtype=jnp.float32) / jnp.sqrt(hid2)
        bfc = jax.random.normal(k[7], (1, out_feats), dtype=jnp.float32) * 0.1
        return (a1, a2, x, w1, b1, w2, b2, wfc, bfc)

    key = jax.random.PRNGKey(0)
    k_small, k_big = jax.random.split(key)

    # Case 1: small shapes consistent with the module's usage -> fused single-kernel fast path.
    args_small = make_case(k_small, n0=16, n1=8, n2=8,
                           in_feats=16, hid1=32, hid2=32, out_feats=8)
    out_small = jax.block_until_ready(gcn_forward(*args_small))
    ref_small = _reference(*args_small)
    assert out_small.shape == ref_small.shape
    assert jnp.allclose(out_small, ref_small, atol=5e-2, rtol=5e-2), \
        float(jnp.max(jnp.abs(out_small - ref_small)))

    # Case 2: larger graph with max_tile=128 to exercise the tiled (grid) path with a
    # VMEM-resident source-feature matrix and >=2 parallel row tiles.
    args_big = make_case(k_big, n0=384, n1=320, n2=256,
                         in_feats=64, hid1=96, hid2=64, out_feats=10)
    out_big = jax.block_until_ready(gcn_forward(*args_big, max_tile=128))
    ref_big = _reference(*args_big)
    assert out_big.shape == ref_big.shape
    assert jnp.allclose(out_big, ref_big, atol=5e-2, rtol=5e-2), \
        float(jnp.max(jnp.abs(out_big - ref_big)))

    print("KERNEL_OK")
</pallas_src>

<mosaic_0001>
module attributes {stable_mosaic.version = 11 : i64} {
  func.func @_gcn_fused_kernel(%arg0: memref<128x128xbf16, #tpu.memory_space<vmem>>, %arg1: memref<128x128xbf16, #tpu.memory_space<vmem>>, %arg2: memref<128x128xbf16, #tpu.memory_space<vmem>>, %arg3: memref<1x128xf32, #tpu.memory_space<vmem>>, %arg4: memref<128x128xbf16, #tpu.memory_space<vmem>>, %arg5: memref<128x128xbf16, #tpu.memory_space<vmem>>, %arg6: memref<1x128xf32, #tpu.memory_space<vmem>>, %arg7: memref<128x128xbf16, #tpu.memory_space<vmem>>, %arg8: memref<1x128xf32, #tpu.memory_space<vmem>>, %arg9: memref<128x128xf32, #tpu.memory_space<vmem>>) attributes {dimension_semantics = [], scalar_prefetch = 0 : i64, scratch_operands = 0 : i64, tpu.core_type = #tpu.core_type<tc>} {
    %c0 = arith.constant 0 : index
    %c0_0 = arith.constant 0 : index
    %0 = vector.load %arg0[%c0, %c0_0] : memref<128x128xbf16, #tpu.memory_space<vmem>>, vector<128x128xbf16>
    %c0_1 = arith.constant 0 : index
    %c0_2 = arith.constant 0 : index
    %1 = vector.load %arg1[%c0_1, %c0_2] : memref<128x128xbf16, #tpu.memory_space<vmem>>, vector<128x128xbf16>
    %cst = arith.constant dense<0.000000e+00> : vector<128x128xf32>
    %2 = tpu.matmul %0, %1, %cst {dimension_numbers = #tpu.dot_dimension_numbers<[1], [0], [0], [1], [0, 0, 1, 1], [], []>} : vector<128x128xbf16>, vector<128x128xbf16>, vector<128x128xf32> -> vector<128x128xf32>
    %3 = arith.truncf %2 : vector<128x128xf32> to vector<128x128xbf16>
    %c0_3 = arith.constant 0 : index
    %c0_4 = arith.constant 0 : index
    %4 = vector.load %arg2[%c0_3, %c0_4] : memref<128x128xbf16, #tpu.memory_space<vmem>>, vector<128x128xbf16>
    %cst_5 = arith.constant dense<0.000000e+00> : vector<128x128xf32>
    %5 = tpu.matmul %3, %4, %cst_5 {dimension_numbers = #tpu.dot_dimension_numbers<[1], [0], [0], [1], [0, 0, 1, 1], [], []>} : vector<128x128xbf16>, vector<128x128xbf16>, vector<128x128xf32> -> vector<128x128xf32>
    %c0_6 = arith.constant 0 : index
    %c0_7 = arith.constant 0 : index
    %6 = vector.load %arg3[%c0_6, %c0_7] : memref<1x128xf32, #tpu.memory_space<vmem>>, vector<1x128xf32>
    %7 = vector.broadcast %6 : vector<1x128xf32> to vector<128x128xf32>
    %8 = arith.addf %5, %7 : vector<128x128xf32>
    %9 = arith.negf %8 : vector<128x128xf32>
    %10 = math.exp %9 : vector<128x128xf32>
    %cst_8 = arith.constant 1.000000e+00 : f32
    %11 = vector.broadcast %cst_8 : f32 to vector<128x128xf32>
    %12 = arith.addf %11, %10 : vector<128x128xf32>
    %13 = arith.divf %11, %12 : vector<128x128xf32>
    %14 = arith.truncf %13 : vector<128x128xf32> to vector<128x128xbf16>
    %c0_9 = arith.constant 0 : index
    %c0_10 = arith.constant 0 : index
    %15 = vector.load %arg4[%c0_9, %c0_10] : memref<128x128xbf16, #tpu.memory_space<vmem>>, vector<128x128xbf16>
    %cst_11 = arith.constant dense<0.000000e+00> : vector<128x128xf32>
    %16 = tpu.matmul %15, %14, %cst_11 {dimension_numbers = #tpu.dot_dimension_numbers<[1], [0], [0], [1], [0, 0, 1, 1], [], []>} : vector<128x128xbf16>, vector<128x128xbf16>, vector<128x128xf32> -> vector<128x128xf32>
    %17 = arith.truncf %16 : vector<128x128xf32> to vector<128x128xbf16>
    %c0_12 = arith.constant 0 : index
    %c0_13 = arith.constant 0 : index
    %18 = vector.load %arg5[%c0_12, %c0_13] : memref<128x128xbf16, #tpu.memory_space<vmem>>, vector<128x128xbf16>
    %cst_14 = arith.constant dense<0.000000e+00> : vector<128x128xf32>
    %19 = tpu.matmul %17, %18, %cst_14 {dimension_numbers = #tpu.dot_dimension_numbers<[1], [0], [0], [1], [0, 0, 1, 1], [], []>} : vector<128x128xbf16>, vector<128x128xbf16>, vector<128x128xf32> -> vector<128x128xf32>
    %c0_15 = arith.constant 0 : index
    %c0_16 = arith.constant 0 : index
    %20 = vector.load %arg6[%c0_15, %c0_16] : memref<1x128xf32, #tpu.memory_space<vmem>>, vector<1x128xf32>
    %21 = vector.broadcast %20 : vector<1x128xf32> to vector<128x128xf32>
    %22 = arith.addf %19, %21 : vector<128x128xf32>
    %23 = arith.negf %22 : vector<128x128xf32>
    %24 = math.exp %23 : vector<128x128xf32>
    %cst_17 = arith.constant 1.000000e+00 : f32
    %25 = vector.broadcast %cst_17 : f32 to vector<128x128xf32>
    %26 = arith.addf %25, %24 : vector<128x128xf32>
    %27 = arith.divf %25, %26 : vector<128x128xf32>
    %28 = arith.truncf %27 : vector<128x128xf32> to vector<128x128xbf16>
    %c0_18 = arith.constant 0 : index
    %c0_19 = arith.constant 0 : index
    %29 = vector.load %arg7[%c0_18, %c0_19] : memref<128x128xbf16, #tpu.memory_space<vmem>>, vector<128x128xbf16>
    %cst_20 = arith.constant dense<0.000000e+00> : vector<128x128xf32>
    %30 = tpu.matmul %28, %29, %cst_20 {dimension_numbers = #tpu.dot_dimension_numbers<[1], [0], [0], [1], [0, 0, 1, 1], [], []>} : vector<128x128xbf16>, vector<128x128xbf16>, vector<128x128xf32> -> vector<128x128xf32>
    %c0_21 = arith.constant 0 : index
    %c0_22 = arith.constant 0 : index
    %31 = vector.load %arg8[%c0_21, %c0_22] : memref<1x128xf32, #tpu.memory_space<vmem>>, vector<1x128xf32>
    %32 = vector.broadcast %31 : vector<1x128xf32> to vector<128x128xf32>
    %33 = arith.addf %30, %32 : vector<128x128xf32>
    %c0_23 = arith.constant 0 : index
    %c0_24 = arith.constant 0 : index
    %34 = vector.load %arg9[%c0_23, %c0_24] : memref<128x128xf32, #tpu.memory_space<vmem>>, vector<128x128xf32>
    tpu.vector_store %arg9[%c0_23, %c0_24], %33 {strides = array<i32>} : memref<128x128xf32, #tpu.memory_space<vmem>>, vector<128x128xf32>,
    return
  }
}

</mosaic_0001>

<llo_original>
// kernel: tpu_custom_call.1
$region0: #{tpu_custom_call.1}
  #allocation0 [shape = 'u32[]', space=smem, size = 0x4, offset = 0x4, fixed_abs, tag = 'smem constant byte address 0x4 - core index']
  #allocation1 [shape = 'u32[72,128]{1,0:T(1,128)}', space=vmem, size = 0x9000, scoped, tag = 'internal scratch']
  %s0 = inlined_call_operand.hbm [shape: bf16[128,128], index: 0, kind: input, shape index: {}]
  %s1 = inlined_call_operand.hbm [shape: bf16[128,128], index: 1, kind: input, shape index: {}]
  %s2 = inlined_call_operand.hbm [shape: bf16[128,128], index: 2, kind: input, shape index: {}]
  %s3 = inlined_call_operand.vmem [shape: f32[1,128], index: 3, kind: input, shape index: {}]
  %s4 = inlined_call_operand.hbm [shape: bf16[128,128], index: 4, kind: input, shape index: {}]
  %s5 = inlined_call_operand.hbm [shape: bf16[128,128], index: 5, kind: input, shape index: {}]
  %s6 = inlined_call_operand.vmem [shape: f32[1,128], index: 6, kind: input, shape index: {}]
  %s7 = inlined_call_operand.hbm [shape: bf16[128,128], index: 7, kind: input, shape index: {}]
  %s8 = inlined_call_operand.vmem [shape: f32[1,128], index: 8, kind: input, shape index: {}]
  %s9 = inlined_call_operand.hbm [shape: f32[128,128], index: 9, kind: output, shape index: {}]
  %s10 = sld [smem:[#allocation0]]
  $region70: #{tpu_custom_call.1} parent=0
    _
  %s12 = ssub.s32 1, %s10
  %s13 = scalar_select 0, %s12, %s10
  $region1: #{tpu_custom_call.1} parent=0
    #allocation2 [shape = 'u8[32768]{0}', space=vmem, size = 0x8000, scoped, tag = 'input window, operand 0, single buffered']
    #allocation3 [shape = 's32[1]{0}', space=sflag, size = 0x4, scoped, tag = 'scoped memory for tpu_custom_call.1']
    #allocation4 [shape = 's32[1]{0}', space=sflag, size = 0x4, scoped, tag = 'scoped memory for tpu_custom_call.1']
    #allocation5 [shape = 'u8[32768]{0}', space=vmem, size = 0x8000, scoped, tag = 'input window, operand 1, single buffered']
    #allocation6 [shape = 's32[1]{0}', space=sflag, size = 0x4, scoped, tag = 'scoped memory for tpu_custom_call.1']
    #allocation7 [shape = 'u8[32768]{0}', space=vmem, size = 0x8000, scoped, tag = 'input window, operand 2, single buffered']
    #allocation8 [shape = 'u8[32768]{0}', space=vmem, size = 0x8000, scoped, tag = 'input window, operand 4, single buffered']
    #allocation9 [shape = 's32[1]{0}', space=sflag, size = 0x4, scoped, tag = 'scoped memory for tpu_custom_call.1']
    #allocation10 [shape = 'u8[32768]{0}', space=vmem, size = 0x8000, scoped, tag = 'input window, operand 5, single buffered']
    #allocation11 [shape = 'u8[32768]{0}', space=vmem, size = 0x8000, scoped, tag = 'input window, operand 7, single buffered']
    #allocation12 [shape = 's32[1]{0}', space=sflag, size = 0x4, scoped, tag = 'scoped memory for tpu_custom_call.1']
    #allocation13 [shape = 'u8[65536]{0}', space=vmem, size = 0x10000, scoped, tag = 'output window, operand 0, single buffered']
    %14 = vsyncpa [#allocation3], 0
    %15 = vsyncpa [#allocation6], 0
    %16 = vsyncpa [#allocation9], 0
    %17 = vsyncpa [#allocation12], 0
    %18 = vsyncpa [#allocation4], 0
    // Predicated region
    $region2: #{tpu_custom_call.1} parent=1 // pred_check
      _
    $region3: #{tpu_custom_call.1} parent=1 // pred_check_branch
      %20 = sbr.rel (0) target = $region5
    $region4: #{tpu_custom_call.1} parent=1 // pred_region
      %22 = vsyncadd [#allocation3], 0
      %s23 = sshll.u32 %s0, 4
      %s24 = int_to_ptr.hbm [resolvable:$true] %s23
      %s25 = sshll.u32 [#allocation2], 4
      %s26 = int_to_ptr.vmem [resolvable:$true] %s25
      %31 = dma.hbm_to_vmem [thread:$0]  %s24, 1024, %s26, [#allocation3], 64, 64, 4
    $region5: #{tpu_custom_call.1} parent=1 // pred_fallthru
      _
    // Predicated region
    $region6: #{tpu_custom_call.1} parent=1 // pred_check
      _
    $region7: #{tpu_custom_call.1} parent=1 // pred_check_branch
      %33 = sbr.rel (0) target = $region9
    $region8: #{tpu_custom_call.1} parent=1 // pred_region
      %35 = vsyncadd [#allocation6], 0
      %s36 = sshll.u32 %s1, 4
      %s37 = int_to_ptr.hbm [resolvable:$true] %s36
      %s38 = sshll.u32 [#allocation5], 4
      %s39 = int_to_ptr.vmem [resolvable:$true] %s38
      %44 = dma.hbm_to_vmem [thread:$0]  %s37, 1024, %s39, [#allocation6], 64, 64, 4
    $region9: #{tpu_custom_call.1} parent=1 // pred_fallthru
      _
    // Predicated region
    $region10: #{tpu_custom_call.1} parent=1 // pred_check
      _
    $region11: #{tpu_custom_call.1} parent=1 // pred_check_branch
      %46 = sbr.rel (0) target = $region13
    $region12: #{tpu_custom_call.1} parent=1 // pred_region
      %48 = vsyncadd [#allocation6], 0
      %s49 = sshll.u32 %s2, 4
      %s50 = int_to_ptr.hbm [resolvable:$true] %s49
      %s51 = sshll.u32 [#allocation7], 4
      %s52 = int_to_ptr.vmem [resolvable:$true] %s51
      %57 = dma.hbm_to_vmem [thread:$0]  %s50, 1024, %s52, [#allocation6], 64, 64, 4
    $region13: #{tpu_custom_call.1} parent=1 // pred_fallthru
      _
    // Predicated region
    $region14: #{tpu_custom_call.1} parent=1 // pred_check
      _
    $region15: #{tpu_custom_call.1} parent=1 // pred_check_branch
      %59 = sbr.rel (0) target = $region17
    $region16: #{tpu_custom_call.1} parent=1 // pred_region
      _
    $region17: #{tpu_custom_call.1} parent=1 // pred_fallthru
      _
    // Predicated region
    $region18: #{tpu_custom_call.1} parent=1 // pred_check
      _
    $region19: #{tpu_custom_call.1} parent=1 // pred_check_branch
      %61 = sbr.rel (0) target = $region21
    $region20: #{tpu_custom_call.1} parent=1 // pred_region
      %63 = vsyncadd [#allocation9], 0
      %s64 = sshll.u32 %s4, 4
      %s65 = int_to_ptr.hbm [resolvable:$true] %s64
      %s66 = sshll.u32 [#allocation8], 4
      %s67 = int_to_ptr.vmem [resolvable:$true] %s66
      %72 = dma.hbm_to_vmem [thread:$0]  %s65, 1024, %s67, [#allocation9], 64, 64, 4
    $region21: #{tpu_custom_call.1} parent=1 // pred_fallthru
      _
    // Predicated region
    $region22: #{tpu_custom_call.1} parent=1 // pred_check
      _
    $region23: #{tpu_custom_call.1} parent=1 // pred_check_branch
      %74 = sbr.rel (0) target = $region25
    $region24: #{tpu_custom_call.1} parent=1 // pred_region
      %76 = vsyncadd [#allocation9], 0
      %s77 = sshll.u32 %s5, 4
      %s78 = int_to_ptr.hbm [resolvable:$true] %s77
      %s79 = sshll.u32 [#allocation10], 4
      %s80 = int_to_ptr.vmem [resolvable:$true] %s79
      %85 = dma.hbm_to_vmem [thread:$0]  %s78, 1024, %s80, [#allocation9], 64, 64, 4
    $region25: #{tpu_custom_call.1} parent=1 // pred_fallthru
      _
    // Predicated region
    $region26: #{tpu_custom_call.1} parent=1 // pred_check
      _
    $region27: #{tpu_custom_call.1} parent=1 // pred_check_branch
      %87 = sbr.rel (0) target = $region29
    $region28: #{tpu_custom_call.1} parent=1 // pred_region
      _
    $region29: #{tpu_custom_call.1} parent=1 // pred_fallthru
      _
    // Predicated region
    $region30: #{tpu_custom_call.1} parent=1 // pred_check
      _
    $region31: #{tpu_custom_call.1} parent=1 // pred_check_branch
      %89 = sbr.rel (0) target = $region33
    $region32: #{tpu_custom_call.1} parent=1 // pred_region
      %91 = vsyncadd [#allocation12], 0
      %s92 = sshll.u32 %s7, 4
      %s93 = int_to_ptr.hbm [resolvable:$true] %s92
      %s94 = sshll.u32 [#allocation11], 4
      %s95 = int_to_ptr.vmem [resolvable:$true] %s94
      %100 = dma.hbm_to_vmem [thread:$0]  %s93, 1024, %s95, [#allocation12], 64, 64, 4
    $region33: #{tpu_custom_call.1} parent=1 // pred_fallthru
      _
    // Predicated region
    $region34: #{tpu_custom_call.1} parent=1 // pred_check
      _
    $region35: #{tpu_custom_call.1} parent=1 // pred_check_branch
      %102 = sbr.rel (0) target = $region37
    $region36: #{tpu_custom_call.1} parent=1 // pred_region
      _
    $region37: #{tpu_custom_call.1} parent=1 // pred_fallthru
      _
    // Predicated region
    $region38: #{tpu_custom_call.1} parent=1 // pred_check
      _
    $region39: #{tpu_custom_call.1} parent=1 // pred_check_branch
      %104 = sbr.rel (0) target = $region41
    $region40: #{tpu_custom_call.1} parent=1 // pred_region
      %106 = dma.done [#allocation3], 1024
    $region41: #{tpu_custom_call.1} parent=1 // pred_fallthru
      _
    // Predicated region
    $region42: #{tpu_custom_call.1} parent=1 // pred_check
      _
    $region43: #{tpu_custom_call.1} parent=1 // pred_check_branch
      %108 = sbr.rel (0) target = $region45
    $region44: #{tpu_custom_call.1} parent=1 // pred_region
      %110 = dma.done [#allocation6], 1024
    $region45: #{tpu_custom_call.1} parent=1 // pred_fallthru
      _
    // Predicated region
    $region46: #{tpu_custom_call.1} parent=1 // pred_check
      _
    $region47: #{tpu_custom_call.1} parent=1 // pred_check_branch
      %112 = sbr.rel (0) target = $region49
    $region48: #{tpu_custom_call.1} parent=1 // pred_region
      %114 = dma.done [#allocation6], 1024
    $region49: #{tpu_custom_call.1} parent=1 // pred_fallthru
      _
    // Predicated region
    $region50: #{tpu_custom_call.1} parent=1 // pred_check
      _
    $region51: #{tpu_custom_call.1} parent=1 // pred_check_branch
      %116 = sbr.rel (0) target = $region53
    $region52: #{tpu_custom_call.1} parent=1 // pred_region
      %118 = dma.done [#allocation9], 1024
    $region53: #{tpu_custom_call.1} parent=1 // pred_fallthru
      _
    // Predicated region
    $region54: #{tpu_custom_call.1} parent=1 // pred_check
      _
    $region55: #{tpu_custom_call.1} parent=1 // pred_check_branch
      %120 = sbr.rel (0) target = $region57
    $region56: #{tpu_custom_call.1} parent=1 // pred_region
      %122 = dma.done [#allocation9], 1024
    $region57: #{tpu_custom_call.1} parent=1 // pred_fallthru
      _
    // Predicated region
    $region58: #{tpu_custom_call.1} parent=1 // pred_check
      _
    $region59: #{tpu_custom_call.1} parent=1 // pred_check_branch
      %124 = sbr.rel (0) target = $region61
    $region60: #{tpu_custom_call.1} parent=1 // pred_region
      %126 = dma.done [#allocation12], 1024
    $region61: #{tpu_custom_call.1} parent=1 // pred_fallthru
      _
    %v127 = vld [vmem:[#allocation2] sm:$0xf]
    %v128 = vld [vmem:[#allocation2 + $0x4] sm:$0xf]
    %v129 = vld [vmem:[#allocation2 + $0x8] sm:$0xf]
    %v130 = vld [vmem:[#allocation2 + $0xc] sm:$0xf]
    %v131 = vld [vmem:[#allocation2 + $0x10] sm:$0xf]
    %v132 = vld [vmem:[#allocation2 + $0x14] sm:$0xf]
    %v133 = vld [vmem:[#allocation2 + $0x18] sm:$0xf]
    %v134 = vld [vmem:[#allocation2 + $0x1c] sm:$0xf]
    %v135 = vld [vmem:[#allocation2 + $0x20] sm:$0xf]
    %v136 = vld [vmem:[#allocation2 + $0x24] sm:$0xf]
    %v137 = vld [vmem:[#allocation2 + $0x28] sm:$0xf]
    %v138 = vld [vmem:[#allocation2 + $0x2c] sm:$0xf]
    %v139 = vld [vmem:[#allocation2 + $0x30] sm:$0xf]
    %v140 = vld [vmem:[#allocation2 + $0x34] sm:$0xf]
    %v141 = vld [vmem:[#allocation2 + $0x38] sm:$0xf]
    %v142 = vld [vmem:[#allocation2 + $0x3c] sm:$0xf]
    %v143 = vld [vmem:[#allocation5] sm:$0xf]
    %v144 = vld [vmem:[#allocation5 + $0x4] sm:$0xf]
    %v145 = vld [vmem:[#allocation5 + $0x8] sm:$0xf]
    %v146 = vld [vmem:[#allocation5 + $0xc] sm:$0xf]
    %v147 = vld [vmem:[#allocation5 + $0x10] sm:$0xf]
    %v148 = vld [vmem:[#allocation5 + $0x14] sm:$0xf]
    %v149 = vld [vmem:[#allocation5 + $0x18] sm:$0xf]
    %v150 = vld [vmem:[#allocation5 + $0x1c] sm:$0xf]
    %v151 = vld [vmem:[#allocation5 + $0x20] sm:$0xf]
    %v152 = vld [vmem:[#allocation5 + $0x24] sm:$0xf]
    %v153 = vld [vmem:[#allocation5 + $0x28] sm:$0xf]
    %v154 = vld [vmem:[#allocation5 + $0x2c] sm:$0xf]
    %v155 = vld [vmem:[#allocation5 + $0x30] sm:$0xf]
    %v156 = vld [vmem:[#allocation5 + $0x34] sm:$0xf]
    %v157 = vld [vmem:[#allocation5 + $0x38] sm:$0xf]
    %v158 = vld [vmem:[#allocation5 + $0x3c] sm:$0xf]
    %v175 = vunpack.c.l.b16 %v127
    %v176 = vunpack.c.l.b16 %v128
    %v177 = vunpack.c.l.b16 %v129
    %v178 = vunpack.c.l.b16 %v130
    %v179 = vunpack.c.l.b16 %v131
    %v180 = vunpack.c.l.b16 %v132
    %v181 = vunpack.c.l.b16 %v133
    %v182 = vunpack.c.l.b16 %v134
    %v183 = vunpack.c.l.b16 %v135
    %v184 = vunpack.c.l.b16 %v136
    %v185 = vunpack.c.l.b16 %v137
    %v186 = vunpack.c.l.b16 %v138
    %v187 = vunpack.c.l.b16 %v139
    %v188 = vunpack.c.l.b16 %v140
    %v189 = vunpack.c.l.b16 %v141
    %v190 = vunpack.c.l.b16 %v142
    %v191 = vpack.c.b16 %v176, %v175
    %v192 = vpack.c.b16 %v178, %v177
    %v193 = vpack.c.b16 %v180, %v179
    %v194 = vpack.c.b16 %v182, %v181
    %v195 = vpack.c.b16 %v184, %v183
    %v196 = vpack.c.b16 %v186, %v185
    %v197 = vpack.c.b16 %v188, %v187
    %v198 = vpack.c.b16 %v190, %v189
    %v223 = vunpack.c.l.b16 %v143
    %v224 = vunpack.c.l.b16 %v144
    %v225 = vunpack.c.l.b16 %v145
    %v226 = vunpack.c.l.b16 %v146
    %v227 = vunpack.c.l.b16 %v147
    %v228 = vunpack.c.l.b16 %v148
    %v229 = vunpack.c.l.b16 %v149
    %v230 = vunpack.c.l.b16 %v150
    %v231 = vunpack.c.l.b16 %v151
    %v232 = vunpack.c.l.b16 %v152
    %v233 = vunpack.c.l.b16 %v153
    %v234 = vunpack.c.l.b16 %v154
    %v235 = vunpack.c.l.b16 %v155
    %v236 = vunpack.c.l.b16 %v156
    %v237 = vunpack.c.l.b16 %v157
    %v238 = vunpack.c.l.b16 %v158
    %v239 = vpack.c.b16 %v224, %v223
    %v240 = vpack.c.b16 %v226, %v225
    %v241 = vpack.c.b16 %v228, %v227
    %v242 = vpack.c.b16 %v230, %v229
    %v243 = vpack.c.b16 %v232, %v231
    %v244 = vpack.c.b16 %v234, %v233
    %v245 = vpack.c.b16 %v236, %v235
    %v246 = vpack.c.b16 %v238, %v237
    %255 = vmatpush.bf16.msra.mxu0 %v246
    %256 = vmatpush.bf16.msra.mxu0 %v245
    %257 = vmatpush.bf16.msra.mxu0 %v244
    %258 = vmatpush.bf16.msra.mxu0 %v243
    %259 = vmatpush.bf16.msra.mxu0 %v242
    %260 = vmatpush.bf16.msra.mxu0 %v241
    %261 = vmatpush.bf16.msra.mxu0 %v240
    %262 = vmatpush.bf16.msra.mxu0 %v239
    %263 = vmatmul.bf16.gmra.mxu0 %v191
    %v264 = vpop.f32.mrf.mxu0
    %v265 = vadd.f32 0.0, %v264
    %v266 = vpop.f32.mrf.mxu0
    %v267 = vadd.f32 0.0, %v266
    %268 = vmatmul.bf16.gmra.mxu0 %v192
    %v269 = vpop.f32.mrf.mxu0
    %v270 = vadd.f32 0.0, %v269
    %v271 = vpop.f32.mrf.mxu0
    %v272 = vadd.f32 0.0, %v271
    %273 = vmatmul.bf16.gmra.mxu0 %v193
    %v274 = vpop.f32.mrf.mxu0
    %v275 = vadd.f32 0.0, %v274
    %v276 = vpop.f32.mrf.mxu0
    %v277 = vadd.f32 0.0, %v276
    %278 = vmatmul.bf16.gmra.mxu0 %v194
    %v279 = vpop.f32.mrf.mxu0
    %v280 = vadd.f32 0.0, %v279
    %v281 = vpop.f32.mrf.mxu0
    %v282 = vadd.f32 0.0, %v281
    %283 = vmatmul.bf16.gmra.mxu0 %v195
    %v284 = vpop.f32.mrf.mxu0
    %v285 = vadd.f32 0.0, %v284
    %v286 = vpop.f32.mrf.mxu0
    %v287 = vadd.f32 0.0, %v286
    %288 = vmatmul.bf16.gmra.mxu0 %v196
    %v289 = vpop.f32.mrf.mxu0
    %v290 = vadd.f32 0.0, %v289
    %v291 = vpop.f32.mrf.mxu0
    %v292 = vadd.f32 0.0, %v291
    %293 = vmatmul.bf16.gmra.mxu0 %v197
    %v294 = vpop.f32.mrf.mxu0
    %v295 = vadd.f32 0.0, %v294
    %v296 = vpop.f32.mrf.mxu0
    %v297 = vadd.f32 0.0, %v296
    %298 = vmatmul.bf16.gmra.mxu0 %v198
    %v299 = vpop.f32.mrf.mxu0
    %v300 = vadd.f32 0.0, %v299
    %v301 = vpop.f32.mrf.mxu0
    %v302 = vadd.f32 0.0, %v301
    %303 = vdwg.mxu0
    %v304 = vpack.c.bf16 %v267, %v265
    %v305 = vpack.c.bf16 %v272, %v270
    %v306 = vpack.c.bf16 %v277, %v275
    %v307 = vpack.c.bf16 %v282, %v280
    %v308 = vpack.c.bf16 %v287, %v285
    %v309 = vpack.c.bf16 %v292, %v290
    %v310 = vpack.c.bf16 %v297, %v295
    %v311 = vpack.c.bf16 %v302, %v300
    %v312 = vld [vmem:[#allocation7] sm:$0xf]
    %v313 = vld [vmem:[#allocation7 + $0x4] sm:$0xf]
    %v314 = vld [vmem:[#allocation7 + $0x8] sm:$0xf]
    %v315 = vld [vmem:[#allocation7 + $0xc] sm:$0xf]
    %v316 = vld [vmem:[#allocation7 + $0x10] sm:$0xf]
    %v317 = vld [vmem:[#allocation7 + $0x14] sm:$0xf]
    %v318 = vld [vmem:[#allocation7 + $0x18] sm:$0xf]
    %v319 = vld [vmem:[#allocation7 + $0x1c] sm:$0xf]
    %v320 = vld [vmem:[#allocation7 + $0x20] sm:$0xf]
    %v321 = vld [vmem:[#allocation7 + $0x24] sm:$0xf]
    %v322 = vld [vmem:[#allocation7 + $0x28] sm:$0xf]
    %v323 = vld [vmem:[#allocation7 + $0x2c] sm:$0xf]
    %v324 = vld [vmem:[#allocation7 + $0x30] sm:$0xf]
    %v325 = vld [vmem:[#allocation7 + $0x34] sm:$0xf]
    %v326 = vld [vmem:[#allocation7 + $0x38] sm:$0xf]
    %v327 = vld [vmem:[#allocation7 + $0x3c] sm:$0xf]
    %v328 = vld [vmem:[%s3] sm:$0x1]
    %v330 = vperm.slane %v328, 0
    %v348 = vunpack.c.l.b16 %v312
    %v349 = vunpack.c.l.b16 %v313
    %v350 = vunpack.c.l.b16 %v314
    %v351 = vunpack.c.l.b16 %v315
    %v352 = vunpack.c.l.b16 %v316
    %v353 = vunpack.c.l.b16 %v317
    %v354 = vunpack.c.l.b16 %v318
    %v355 = vunpack.c.l.b16 %v319
    %v356 = vunpack.c.l.b16 %v320
    %v357 = vunpack.c.l.b16 %v321
    %v358 = vunpack.c.l.b16 %v322
    %v359 = vunpack.c.l.b16 %v323
    %v360 = vunpack.c.l.b16 %v324
    %v361 = vunpack.c.l.b16 %v325
    %v362 = vunpack.c.l.b16 %v326
    %v363 = vunpack.c.l.b16 %v327
    %v364 = vpack.c.b16 %v349, %v348
    %v365 = vpack.c.b16 %v351, %v350
    %v366 = vpack.c.b16 %v353, %v352
    %v367 = vpack.c.b16 %v355, %v354
    %v368 = vpack.c.b16 %v357, %v356
    %v369 = vpack.c.b16 %v359, %v358
    %v370 = vpack.c.b16 %v361, %v360
    %v371 = vpack.c.b16 %v363, %v362
    %380 = vmatpush.bf16.msra.mxu0 %v371
    %381 = vmatpush.bf16.msra.mxu0 %v370
    %382 = vmatpush.bf16.msra.mxu0 %v369
    %383 = vmatpush.bf16.msra.mxu0 %v368
    %384 = vmatpush.bf16.msra.mxu0 %v367
    %385 = vmatpush.bf16.msra.mxu0 %v366
    %386 = vmatpush.bf16.msra.mxu0 %v365
    %387 = vmatpush.bf16.msra.mxu0 %v364
    %388 = vmatmul.bf16.gmra.mxu0 %v304
    %v389 = vpop.f32.mrf.mxu0
    %v390 = vadd.f32 %v330, %v389
    %v391 = vpop.f32.mrf.mxu0
    %v392 = vadd.f32 %v330, %v391
    %393 = vmatmul.bf16.gmra.mxu0 %v305
    %v394 = vpop.f32.mrf.mxu0
    %v395 = vadd.f32 %v330, %v394
    %v396 = vpop.f32.mrf.mxu0
    %v397 = vadd.f32 %v330, %v396
    %398 = vmatmul.bf16.gmra.mxu0 %v306
    %v399 = vpop.f32.mrf.mxu0
    %v400 = vadd.f32 %v330, %v399
    %v401 = vpop.f32.mrf.mxu0
    %v402 = vadd.f32 %v330, %v401
    %403 = vmatmul.bf16.gmra.mxu0 %v307
    %v404 = vpop.f32.mrf.mxu0
    %v405 = vadd.f32 %v330, %v404
    %v406 = vpop.f32.mrf.mxu0
    %v407 = vadd.f32 %v330, %v406
    %408 = vmatmul.bf16.gmra.mxu0 %v308
    %v409 = vpop.f32.mrf.mxu0
    %v410 = vadd.f32 %v330, %v409
    %v411 = vpop.f32.mrf.mxu0
    %v412 = vadd.f32 %v330, %v411
    %413 = vmatmul.bf16.gmra.mxu0 %v309
    %v414 = vpop.f32.mrf.mxu0
    %v415 = vadd.f32 %v330, %v414
    %v416 = vpop.f32.mrf.mxu0
    %v417 = vadd.f32 %v330, %v416
    %418 = vmatmul.bf16.gmra.mxu0 %v310
    %v419 = vpop.f32.mrf.mxu0
    %v420 = vadd.f32 %v330, %v419
    %v421 = vpop.f32.mrf.mxu0
    %v422 = vadd.f32 %v330, %v421
    %423 = vmatmul.bf16.gmra.mxu0 %v311
    %v424 = vpop.f32.mrf.mxu0
    %v425 = vadd.f32 %v330, %v424
    %v426 = vpop.f32.mrf.mxu0
    %v427 = vadd.f32 %v330, %v426
    %428 = vdwg.mxu0
    %v429 = vxor.u32 %v390, 2147483648
    %v430 = vxor.u32 %v392, 2147483648
    %v431 = vxor.u32 %v395, 2147483648
    %v432 = vxor.u32 %v397, 2147483648
    %v433 = vxor.u32 %v400, 2147483648
    %v434 = vxor.u32 %v402, 2147483648
    %v435 = vxor.u32 %v405, 2147483648
    %v436 = vxor.u32 %v407, 2147483648
    %v437 = vxor.u32 %v410, 2147483648
    %v438 = vxor.u32 %v412, 2147483648
    %v439 = vxor.u32 %v415, 2147483648
    %v440 = vxor.u32 %v417, 2147483648
    %v441 = vxor.u32 %v420, 2147483648
    %v442 = vxor.u32 %v422, 2147483648
    %v443 = vxor.u32 %v425, 2147483648
    %v444 = vxor.u32 %v427, 2147483648
    %v445 = vmul.f32 %v429, 1.442695
    %v446 = vpow.pop %v445
    %v447 = vmul.f32 %v430, 1.442695
    %v448 = vpow.pop %v447
    %v449 = vmul.f32 %v431, 1.442695
    %v450 = vpow.pop %v449
    %v451 = vmul.f32 %v432, 1.442695
    %v452 = vpow.pop %v451
    %v453 = vmul.f32 %v433, 1.442695
    %v454 = vpow.pop %v453
    %v455 = vmul.f32 %v434, 1.442695
    %v456 = vpow.pop %v455
    %v457 = vmul.f32 %v435, 1.442695
    %v458 = vpow.pop %v457
    %v459 = vmul.f32 %v436, 1.442695
    %v460 = vpow.pop %v459
    %v461 = vmul.f32 %v437, 1.442695
    %v462 = vpow.pop %v461
    %v463 = vmul.f32 %v438, 1.442695
    %v464 = vpow.pop %v463
    %v465 = vmul.f32 %v439, 1.442695
    %v466 = vpow.pop %v465
    %v467 = vmul.f32 %v440, 1.442695
    %v468 = vpow.pop %v467
    %v469 = vmul.f32 %v441, 1.442695
    %v470 = vpow.pop %v469
    %v471 = vmul.f32 %v442, 1.442695
    %v472 = vpow.pop %v471
    %v473 = vmul.f32 %v443, 1.442695
    %v474 = vpow.pop %v473
    %v475 = vmul.f32 %v444, 1.442695
    %v476 = vpow.pop %v475
    %v477 = vadd.f32 %v446, 1.0
    %v478 = vadd.f32 %v448, 1.0
    %v479 = vadd.f32 %v450, 1.0
    %v480 = vadd.f32 %v452, 1.0
    %v481 = vadd.f32 %v454, 1.0
    %v482 = vadd.f32 %v456, 1.0
    %v483 = vadd.f32 %v458, 1.0
    %v484 = vadd.f32 %v460, 1.0
    %v485 = vadd.f32 %v462, 1.0
    %v486 = vadd.f32 %v464, 1.0
    %v487 = vadd.f32 %v466, 1.0
    %v488 = vadd.f32 %v468, 1.0
    %v489 = vadd.f32 %v470, 1.0
    %v490 = vadd.f32 %v472, 1.0
    %v491 = vadd.f32 %v474, 1.0
    %v492 = vadd.f32 %v476, 1.0
    %v493 = vrcp.pop %v477
    %v494 = vmul.f32 %v477, %v493
    %v495 = vsub.f32 1.0, %v494
    %v496 = vmul.f32 %v493, %v495
    %v497 = vadd.f32 %v493, %v496
    %vm498 = vweird.f32 %v477
    %vm499 = vweird.f32 %v493
    %vm500 = vmor %vm498, %vm499
    %v501 = vsel %vm500, %v493, %v497
    %v502 = vand.u32 2147483647, %v477
    %vm503 = vcmp.eq.f32.partialorder %v502, 8.507059e+37
    %v504 = vand.u32 %v477, 2147483648
    %v505 = vor.u32 1.1754944e-38, %v504
    %v506 = vsel %vm503, %v505, %v501
    %v507 = vmul.f32 1.0, %v506
    %v508 = vrcp.pop %v478
    %v509 = vmul.f32 %v478, %v508
    %v510 = vsub.f32 1.0, %v509
    %v511 = vmul.f32 %v508, %v510
    %v512 = vadd.f32 %v508, %v511
    %vm513 = vweird.f32 %v478
    %vm514 = vweird.f32 %v508
    %vm515 = vmor %vm513, %vm514
    %v516 = vsel %vm515, %v508, %v512
    %v517 = vand.u32 2147483647, %v478
    %vm518 = vcmp.eq.f32.partialorder %v517, 8.507059e+37
    %v519 = vand.u32 %v478, 2147483648
    %v520 = vor.u32 1.1754944e-38, %v519
    %v521 = vsel %vm518, %v520, %v516
    %v522 = vmul.f32 1.0, %v521
    %v523 = vrcp.pop %v479
    %v524 = vmul.f32 %v479, %v523
    %v525 = vsub.f32 1.0, %v524
    %v526 = vmul.f32 %v523, %v525
    %v527 = vadd.f32 %v523, %v526
    %vm528 = vweird.f32 %v479
    %vm529 = vweird.f32 %v523
    %vm530 = vmor %vm528, %vm529
    %v531 = vsel %vm530, %v523, %v527
    %v532 = vand.u32 2147483647, %v479
    %vm533 = vcmp.eq.f32.partialorder %v532, 8.507059e+37
    %v534 = vand.u32 %v479, 2147483648
    %v535 = vor.u32 1.1754944e-38, %v534
    %v536 = vsel %vm533, %v535, %v531
    %v537 = vmul.f32 1.0, %v536
    %v538 = vrcp.pop %v480
    %v539 = vmul.f32 %v480, %v538
    %v540 = vsub.f32 1.0, %v539
    %v541 = vmul.f32 %v538, %v540
    %v542 = vadd.f32 %v538, %v541
    %vm543 = vweird.f32 %v480
    %vm544 = vweird.f32 %v538
    %vm545 = vmor %vm543, %vm544
    %v546 = vsel %vm545, %v538, %v542
    %v547 = vand.u32 2147483647, %v480
    %vm548 = vcmp.eq.f32.partialorder %v547, 8.507059e+37
    %v549 = vand.u32 %v480, 2147483648
    %v550 = vor.u32 1.1754944e-38, %v549
    %v551 = vsel %vm548, %v550, %v546
    %v552 = vmul.f32 1.0, %v551
    %v553 = vrcp.pop %v481
    %v554 = vmul.f32 %v481, %v553
    %v555 = vsub.f32 1.0, %v554
    %v556 = vmul.f32 %v553, %v555
    %v557 = vadd.f32 %v553, %v556
    %vm558 = vweird.f32 %v481
    %vm559 = vweird.f32 %v553
    %vm560 = vmor %vm558, %vm559
    %v561 = vsel %vm560, %v553, %v557
    %v562 = vand.u32 2147483647, %v481
    %vm563 = vcmp.eq.f32.partialorder %v562, 8.507059e+37
    %v564 = vand.u32 %v481, 2147483648
    %v565 = vor.u32 1.1754944e-38, %v564
    %v566 = vsel %vm563, %v565, %v561
    %v567 = vmul.f32 1.0, %v566
    %v568 = vrcp.pop %v482
    %v569 = vmul.f32 %v482, %v568
    %v570 = vsub.f32 1.0, %v569
    %v571 = vmul.f32 %v568, %v570
    %v572 = vadd.f32 %v568, %v571
    %vm573 = vweird.f32 %v482
    %vm574 = vweird.f32 %v568
    %vm575 = vmor %vm573, %vm574
    %v576 = vsel %vm575, %v568, %v572
    %v577 = vand.u32 2147483647, %v482
    %vm578 = vcmp.eq.f32.partialorder %v577, 8.507059e+37
    %v579 = vand.u32 %v482, 2147483648
    %v580 = vor.u32 1.1754944e-38, %v579
    %v581 = vsel %vm578, %v580, %v576
    %v582 = vmul.f32 1.0, %v581
    %v583 = vrcp.pop %v483
    %v584 = vmul.f32 %v483, %v583
    %v585 = vsub.f32 1.0, %v584
    %v586 = vmul.f32 %v583, %v585
    %v587 = vadd.f32 %v583, %v586
    %vm588 = vweird.f32 %v483
    %vm589 = vweird.f32 %v583
    %vm590 = vmor %vm588, %vm589
    %v591 = vsel %vm590, %v583, %v587
    %v592 = vand.u32 2147483647, %v483
    %vm593 = vcmp.eq.f32.partialorder %v592, 8.507059e+37
    %v594 = vand.u32 %v483, 2147483648
    %v595 = vor.u32 1.1754944e-38, %v594
    %v596 = vsel %vm593, %v595, %v591
    %v597 = vmul.f32 1.0, %v596
    %v598 = vrcp.pop %v484
    %v599 = vmul.f32 %v484, %v598
    %v600 = vsub.f32 1.0, %v599
    %v601 = vmul.f32 %v598, %v600
    %v602 = vadd.f32 %v598, %v601
    %vm603 = vweird.f32 %v484
    %vm604 = vweird.f32 %v598
    %vm605 = vmor %vm603, %vm604
    %v606 = vsel %vm605, %v598, %v602
    %v607 = vand.u32 2147483647, %v484
    %vm608 = vcmp.eq.f32.partialorder %v607, 8.507059e+37
    %v609 = vand.u32 %v484, 2147483648
    %v610 = vor.u32 1.1754944e-38, %v609
    %v611 = vsel %vm608, %v610, %v606
    %v612 = vmul.f32 1.0, %v611
    %v613 = vrcp.pop %v485
    %v614 = vmul.f32 %v485, %v613
    %v615 = vsub.f32 1.0, %v614
    %v616 = vmul.f32 %v613, %v615
    %v617 = vadd.f32 %v613, %v616
    %vm618 = vweird.f32 %v485
    %vm619 = vweird.f32 %v613
    %vm620 = vmor %vm618, %vm619
    %v621 = vsel %vm620, %v613, %v617
    %v622 = vand.u32 2147483647, %v485
    %vm623 = vcmp.eq.f32.partialorder %v622, 8.507059e+37
    %v624 = vand.u32 %v485, 2147483648
    %v625 = vor.u32 1.1754944e-38, %v624
    %v626 = vsel %vm623, %v625, %v621
    %v627 = vmul.f32 1.0, %v626
    %v628 = vrcp.pop %v486
    %v629 = vmul.f32 %v486, %v628
    %v630 = vsub.f32 1.0, %v629
    %v631 = vmul.f32 %v628, %v630
    %v632 = vadd.f32 %v628, %v631
    %vm633 = vweird.f32 %v486
    %vm634 = vweird.f32 %v628
    %vm635 = vmor %vm633, %vm634
    %v636 = vsel %vm635, %v628, %v632
    %v637 = vand.u32 2147483647, %v486
    %vm638 = vcmp.eq.f32.partialorder %v637, 8.507059e+37
    %v639 = vand.u32 %v486, 2147483648
    %v640 = vor.u32 1.1754944e-38, %v639
    %v641 = vsel %vm638, %v640, %v636
    %v642 = vmul.f32 1.0, %v641
    %v643 = vrcp.pop %v487
    %v644 = vmul.f32 %v487, %v643
    %v645 = vsub.f32 1.0, %v644
    %v646 = vmul.f32 %v643, %v645
    %v647 = vadd.f32 %v643, %v646
    %vm648 = vweird.f32 %v487
    %vm649 = vweird.f32 %v643
    %vm650 = vmor %vm648, %vm649
    %v651 = vsel %vm650, %v643, %v647
    %v652 = vand.u32 2147483647, %v487
    %vm653 = vcmp.eq.f32.partialorder %v652, 8.507059e+37
    %v654 = vand.u32 %v487, 2147483648
    %v655 = vor.u32 1.1754944e-38, %v654
    %v656 = vsel %vm653, %v655, %v651
    %v657 = vmul.f32 1.0, %v656
    %v658 = vrcp.pop %v488
    %v659 = vmul.f32 %v488, %v658
    %v660 = vsub.f32 1.0, %v659
    %v661 = vmul.f32 %v658, %v660
    %v662 = vadd.f32 %v658, %v661
    %vm663 = vweird.f32 %v488
    %vm664 = vweird.f32 %v658
    %vm665 = vmor %vm663, %vm664
    %v666 = vsel %vm665, %v658, %v662
    %v667 = vand.u32 2147483647, %v488
    %vm668 = vcmp.eq.f32.partialorder %v667, 8.507059e+37
    %v669 = vand.u32 %v488, 2147483648
    %v670 = vor.u32 1.1754944e-38, %v669
    %v671 = vsel %vm668, %v670, %v666
    %v672 = vmul.f32 1.0, %v671
    %v673 = vrcp.pop %v489
    %v674 = vmul.f32 %v489, %v673
    %v675 = vsub.f32 1.0, %v674
    %v676 = vmul.f32 %v673, %v675
    %v677 = vadd.f32 %v673, %v676
    %vm678 = vweird.f32 %v489
    %vm679 = vweird.f32 %v673
    %vm680 = vmor %vm678, %vm679
    %v681 = vsel %vm680, %v673, %v677
    %v682 = vand.u32 2147483647, %v489
    %vm683 = vcmp.eq.f32.partialorder %v682, 8.507059e+37
    %v684 = vand.u32 %v489, 2147483648
    %v685 = vor.u32 1.1754944e-38, %v684
    %v686 = vsel %vm683, %v685, %v681
    %v687 = vmul.f32 1.0, %v686
    %v688 = vrcp.pop %v490
    %v689 = vmul.f32 %v490, %v688
    %v690 = vsub.f32 1.0, %v689
    %v691 = vmul.f32 %v688, %v690
    %v692 = vadd.f32 %v688, %v691
    %vm693 = vweird.f32 %v490
    %vm694 = vweird.f32 %v688
    %vm695 = vmor %vm693, %vm694
    %v696 = vsel %vm695, %v688, %v692
    %v697 = vand.u32 2147483647, %v490
    %vm698 = vcmp.eq.f32.partialorder %v697, 8.507059e+37
    %v699 = vand.u32 %v490, 2147483648
    %v700 = vor.u32 1.1754944e-38, %v699
    %v701 = vsel %vm698, %v700, %v696
    %v702 = vmul.f32 1.0, %v701
    %v703 = vrcp.pop %v491
    %v704 = vmul.f32 %v491, %v703
    %v705 = vsub.f32 1.0, %v704
    %v706 = vmul.f32 %v703, %v705
    %v707 = vadd.f32 %v703, %v706
    %vm708 = vweird.f32 %v491
    %vm709 = vweird.f32 %v703
    %vm710 = vmor %vm708, %vm709
    %v711 = vsel %vm710, %v703, %v707
    %v712 = vand.u32 2147483647, %v491
    %vm713 = vcmp.eq.f32.partialorder %v712, 8.507059e+37
    %v714 = vand.u32 %v491, 2147483648
    %v715 = vor.u32 1.1754944e-38, %v714
    %v716 = vsel %vm713, %v715, %v711
    %v717 = vmul.f32 1.0, %v716
    %v718 = vrcp.pop %v492
    %v719 = vmul.f32 %v492, %v718
    %v720 = vsub.f32 1.0, %v719
    %v721 = vmul.f32 %v718, %v720
    %v722 = vadd.f32 %v718, %v721
    %vm723 = vweird.f32 %v492
    %vm724 = vweird.f32 %v718
    %vm725 = vmor %vm723, %vm724
    %v726 = vsel %vm725, %v718, %v722
    %v727 = vand.u32 2147483647, %v492
    %vm728 = vcmp.eq.f32.partialorder %v727, 8.507059e+37
    %v729 = vand.u32 %v492, 2147483648
    %v730 = vor.u32 1.1754944e-38, %v729
    %v731 = vsel %vm728, %v730, %v726
    %v732 = vmul.f32 1.0, %v731
    %v733 = vpack.c.bf16 %v522, %v507
    %v734 = vpack.c.bf16 %v552, %v537
    %v735 = vpack.c.bf16 %v582, %v567
    %v736 = vpack.c.bf16 %v612, %v597
    %v737 = vpack.c.bf16 %v642, %v627
    %v738 = vpack.c.bf16 %v672, %v657
    %v739 = vpack.c.bf16 %v702, %v687
    %v740 = vpack.c.bf16 %v732, %v717
    %v741 = vld [vmem:[#allocation8] sm:$0xf]
    %v742 = vld [vmem:[#allocation8 + $0x4] sm:$0xf]
    %v743 = vld [vmem:[#allocation8 + $0x8] sm:$0xf]
    %v744 = vld [vmem:[#allocation8 + $0xc] sm:$0xf]
    %v745 = vld [vmem:[#allocation8 + $0x10] sm:$0xf]
    %v746 = vld [vmem:[#allocation8 + $0x14] sm:$0xf]
    %v747 = vld [vmem:[#allocation8 + $0x18] sm:$0xf]
    %v748 = vld [vmem:[#allocation8 + $0x1c] sm:$0xf]
    %v749 = vld [vmem:[#allocation8 + $0x20] sm:$0xf]
    %v750 = vld [vmem:[#allocation8 + $0x24] sm:$0xf]
    %v751 = vld [vmem:[#allocation8 + $0x28] sm:$0xf]
    %v752 = vld [vmem:[#allocation8 + $0x2c] sm:$0xf]
    %v753 = vld [vmem:[#allocation8 + $0x30] sm:$0xf]
    %v754 = vld [vmem:[#allocation8 + $0x34] sm:$0xf]
    %v755 = vld [vmem:[#allocation8 + $0x38] sm:$0xf]
    %v756 = vld [vmem:[#allocation8 + $0x3c] sm:$0xf]
    %v773 = vunpack.c.l.b16 %v741
    %v774 = vunpack.c.l.b16 %v742
    %v775 = vunpack.c.l.b16 %v743
    %v776 = vunpack.c.l.b16 %v744
    %v777 = vunpack.c.l.b16 %v745
    %v778 = vunpack.c.l.b16 %v746
    %v779 = vunpack.c.l.b16 %v747
    %v780 = vunpack.c.l.b16 %v748
    %v781 = vunpack.c.l.b16 %v749
    %v782 = vunpack.c.l.b16 %v750
    %v783 = vunpack.c.l.b16 %v751
    %v784 = vunpack.c.l.b16 %v752
    %v785 = vunpack.c.l.b16 %v753
    %v786 = vunpack.c.l.b16 %v754
    %v787 = vunpack.c.l.b16 %v755
    %v788 = vunpack.c.l.b16 %v756
    %v789 = vpack.c.b16 %v774, %v773
    %v790 = vpack.c.b16 %v776, %v775
    %v791 = vpack.c.b16 %v778, %v777
    %v792 = vpack.c.b16 %v780, %v779
    %v793 = vpack.c.b16 %v782, %v781
    %v794 = vpack.c.b16 %v784, %v783
    %v795 = vpack.c.b16 %v786, %v785
    %v796 = vpack.c.b16 %v788, %v787
    %805 = vmatpush.bf16.msra.mxu0 %v740
    %806 = vmatpush.bf16.msra.mxu0 %v739
    %807 = vmatpush.bf16.msra.mxu0 %v738
    %808 = vmatpush.bf16.msra.mxu0 %v737
    %809 = vmatpush.bf16.msra.mxu0 %v736
    %810 = vmatpush.bf16.msra.mxu0 %v735
    %811 = vmatpush.bf16.msra.mxu0 %v734
    %812 = vmatpush.bf16.msra.mxu0 %v733
    %813 = vmatmul.bf16.gmra.mxu0 %v789
    %v814 = vpop.f32.mrf.mxu0
    %v815 = vadd.f32 0.0, %v814
    %v816 = vpop.f32.mrf.mxu0
    %v817 = vadd.f32 0.0, %v816
    %818 = vmatmul.bf16.gmra.mxu0 %v790
    %v819 = vpop.f32.mrf.mxu0
    %v820 = vadd.f32 0.0, %v819
    %v821 = vpop.f32.mrf.mxu0
    %v822 = vadd.f32 0.0, %v821
    %823 = vmatmul.bf16.gmra.mxu0 %v791
    %v824 = vpop.f32.mrf.mxu0
    %v825 = vadd.f32 0.0, %v824
    %v826 = vpop.f32.mrf.mxu0
    %v827 = vadd.f32 0.0, %v826
    %828 = vmatmul.bf16.gmra.mxu0 %v792
    %v829 = vpop.f32.mrf.mxu0
    %v830 = vadd.f32 0.0, %v829
    %v831 = vpop.f32.mrf.mxu0
    %v832 = vadd.f32 0.0, %v831
    %833 = vmatmul.bf16.gmra.mxu0 %v793
    %v834 = vpop.f32.mrf.mxu0
    %v835 = vadd.f32 0.0, %v834
    %v836 = vpop.f32.mrf.mxu0
    %v837 = vadd.f32 0.0, %v836
    %838 = vmatmul.bf16.gmra.mxu0 %v794
    %v839 = vpop.f32.mrf.mxu0
    %v840 = vadd.f32 0.0, %v839
    %v841 = vpop.f32.mrf.mxu0
    %v842 = vadd.f32 0.0, %v841
    %843 = vmatmul.bf16.gmra.mxu0 %v795
    %v844 = vpop.f32.mrf.mxu0
    %v845 = vadd.f32 0.0, %v844
    %v846 = vpop.f32.mrf.mxu0
    %v847 = vadd.f32 0.0, %v846
    %848 = vmatmul.bf16.gmra.mxu0 %v796
    %v849 = vpop.f32.mrf.mxu0
    %v850 = vadd.f32 0.0, %v849
    %v851 = vpop.f32.mrf.mxu0
    %v852 = vadd.f32 0.0, %v851
    %853 = vdwg.mxu0
    %v854 = vpack.c.bf16 %v817, %v815
    %v855 = vpack.c.bf16 %v822, %v820
    %v856 = vpack.c.bf16 %v827, %v825
    %v857 = vpack.c.bf16 %v832, %v830
    %v858 = vpack.c.bf16 %v837, %v835
    %v859 = vpack.c.bf16 %v842, %v840
    %v860 = vpack.c.bf16 %v847, %v845
    %v861 = vpack.c.bf16 %v852, %v850
    %v862 = vld [vmem:[#allocation10] sm:$0xf]
    %v863 = vld [vmem:[#allocation10 + $0x4] sm:$0xf]
    %v864 = vld [vmem:[#allocation10 + $0x8] sm:$0xf]
    %v865 = vld [vmem:[#allocation10 + $0xc] sm:$0xf]
    %v866 = vld [vmem:[#allocation10 + $0x10] sm:$0xf]
    %v867 = vld [vmem:[#allocation10 + $0x14] sm:$0xf]
    %v868 = vld [vmem:[#allocation10 + $0x18] sm:$0xf]
    %v869 = vld [vmem:[#allocation10 + $0x1c] sm:$0xf]
    %v870 = vld [vmem:[#allocation10 + $0x20] sm:$0xf]
    %v871 = vld [vmem:[#allocation10 + $0x24] sm:$0xf]
    %v872 = vld [vmem:[#allocation10 + $0x28] sm:$0xf]
    %v873 = vld [vmem:[#allocation10 + $0x2c] sm:$0xf]
    %v874 = vld [vmem:[#allocation10 + $0x30] sm:$0xf]
    %v875 = vld [vmem:[#allocation10 + $0x34] sm:$0xf]
    %v876 = vld [vmem:[#allocation10 + $0x38] sm:$0xf]
    %v877 = vld [vmem:[#allocation10 + $0x3c] sm:$0xf]
    %v878 = vld [vmem:[%s6] sm:$0x1]
    %v880 = vperm.slane %v878, 0
    %v898 = vunpack.c.l.b16 %v862
    %v899 = vunpack.c.l.b16 %v863
    %v900 = vunpack.c.l.b16 %v864
    %v901 = vunpack.c.l.b16 %v865
    %v902 = vunpack.c.l.b16 %v866
    %v903 = vunpack.c.l.b16 %v867
    %v904 = vunpack.c.l.b16 %v868
    %v905 = vunpack.c.l.b16 %v869
    %v906 = vunpack.c.l.b16 %v870
    %v907 = vunpack.c.l.b16 %v871
    %v908 = vunpack.c.l.b16 %v872
    %v909 = vunpack.c.l.b16 %v873
    %v910 = vunpack.c.l.b16 %v874
    %v911 = vunpack.c.l.b16 %v875
    %v912 = vunpack.c.l.b16 %v876
    %v913 = vunpack.c.l.b16 %v877
    %v914 = vpack.c.b16 %v899, %v898
    %v915 = vpack.c.b16 %v901, %v900
    %v916 = vpack.c.b16 %v903, %v902
    %v917 = vpack.c.b16 %v905, %v904
    %v918 = vpack.c.b16 %v907, %v906
    %v919 = vpack.c.b16 %v909, %v908
    %v920 = vpack.c.b16 %v911, %v910
    %v921 = vpack.c.b16 %v913, %v912
    %930 = vmatpush.bf16.msra.mxu0 %v921
    %931 = vmatpush.bf16.msra.mxu0 %v920
    %932 = vmatpush.bf16.msra.mxu0 %v919
    %933 = vmatpush.bf16.msra.mxu0 %v918
    %934 = vmatpush.bf16.msra.mxu0 %v917
    %935 = vmatpush.bf16.msra.mxu0 %v916
    %936 = vmatpush.bf16.msra.mxu0 %v915
    %937 = vmatpush.bf16.msra.mxu0 %v914
    %938 = vmatmul.bf16.gmra.mxu0 %v854
    %v939 = vpop.f32.mrf.mxu0
    %v940 = vadd.f32 %v880, %v939
    %v941 = vpop.f32.mrf.mxu0
    %v942 = vadd.f32 %v880, %v941
    %943 = vmatmul.bf16.gmra.mxu0 %v855
    %v944 = vpop.f32.mrf.mxu0
    %v945 = vadd.f32 %v880, %v944
    %v946 = vpop.f32.mrf.mxu0
    %v947 = vadd.f32 %v880, %v946
    %948 = vmatmul.bf16.gmra.mxu0 %v856
    %v949 = vpop.f32.mrf.mxu0
    %v950 = vadd.f32 %v880, %v949
    %v951 = vpop.f32.mrf.mxu0
    %v952 = vadd.f32 %v880, %v951
    %953 = vmatmul.bf16.gmra.mxu0 %v857
    %v954 = vpop.f32.mrf.mxu0
    %v955 = vadd.f32 %v880, %v954
    %v956 = vpop.f32.mrf.mxu0
    %v957 = vadd.f32 %v880, %v956
    %958 = vmatmul.bf16.gmra.mxu0 %v858
    %v959 = vpop.f32.mrf.mxu0
    %v960 = vadd.f32 %v880, %v959
    %v961 = vpop.f32.mrf.mxu0
    %v962 = vadd.f32 %v880, %v961
    %963 = vmatmul.bf16.gmra.mxu0 %v859
    %v964 = vpop.f32.mrf.mxu0
    %v965 = vadd.f32 %v880, %v964
    %v966 = vpop.f32.mrf.mxu0
    %v967 = vadd.f32 %v880, %v966
    %968 = vmatmul.bf16.gmra.mxu0 %v860
    %v969 = vpop.f32.mrf.mxu0
    %v970 = vadd.f32 %v880, %v969
    %v971 = vpop.f32.mrf.mxu0
    %v972 = vadd.f32 %v880, %v971
    %973 = vmatmul.bf16.gmra.mxu0 %v861
    %v974 = vpop.f32.mrf.mxu0
    %v975 = vadd.f32 %v880, %v974
    %v976 = vpop.f32.mrf.mxu0
    %v977 = vadd.f32 %v880, %v976
    %978 = vdwg.mxu0
    %v979 = vxor.u32 %v940, 2147483648
    %v980 = vxor.u32 %v942, 2147483648
    %v981 = vxor.u32 %v945, 2147483648
    %v982 = vxor.u32 %v947, 2147483648
    %v983 = vxor.u32 %v950, 2147483648
    %v984 = vxor.u32 %v952, 2147483648
    %v985 = vxor.u32 %v955, 2147483648
    %v986 = vxor.u32 %v957, 2147483648
    %v987 = vxor.u32 %v960, 2147483648
    %v988 = vxor.u32 %v962, 2147483648
    %v989 = vxor.u32 %v965, 2147483648
    %v990 = vxor.u32 %v967, 2147483648
    %v991 = vxor.u32 %v970, 2147483648
    %v992 = vxor.u32 %v972, 2147483648
    %v993 = vxor.u32 %v975, 2147483648
    %v994 = vxor.u32 %v977, 2147483648
    %v995 = vmul.f32 %v979, 1.442695
    %v996 = vpow.pop %v995
    %v997 = vmul.f32 %v980, 1.442695
    %v998 = vpow.pop %v997
    %v999 = vmul.f32 %v981, 1.442695
    %v1000 = vpow.pop %v999
    %v1001 = vmul.f32 %v982, 1.442695
    %v1002 = vpow.pop %v1001
    %v1003 = vmul.f32 %v983, 1.442695
    %v1004 = vpow.pop %v1003
    %v1005 = vmul.f32 %v984, 1.442695
    %v1006 = vpow.pop %v1005
    %v1007 = vmul.f32 %v985, 1.442695
    %v1008 = vpow.pop %v1007
    %v1009 = vmul.f32 %v986, 1.442695
    %v1010 = vpow.pop %v1009
    %v1011 = vmul.f32 %v987, 1.442695
    %v1012 = vpow.pop %v1011
    %v1013 = vmul.f32 %v988, 1.442695
    %v1014 = vpow.pop %v1013
    %v1015 = vmul.f32 %v989, 1.442695
    %v1016 = vpow.pop %v1015
    %v1017 = vmul.f32 %v990, 1.442695
    %v1018 = vpow.pop %v1017
    %v1019 = vmul.f32 %v991, 1.442695
    %v1020 = vpow.pop %v1019
    %v1021 = vmul.f32 %v992, 1.442695
    %v1022 = vpow.pop %v1021
    %v1023 = vmul.f32 %v993, 1.442695
    %v1024 = vpow.pop %v1023
    %v1025 = vmul.f32 %v994, 1.442695
    %v1026 = vpow.pop %v1025
    %v1027 = vadd.f32 %v996, 1.0
    %v1028 = vadd.f32 %v998, 1.0
    %v1029 = vadd.f32 %v1000, 1.0
    %v1030 = vadd.f32 %v1002, 1.0
    %v1031 = vadd.f32 %v1004, 1.0
    %v1032 = vadd.f32 %v1006, 1.0
    %v1033 = vadd.f32 %v1008, 1.0
    %v1034 = vadd.f32 %v1010, 1.0
    %v1035 = vadd.f32 %v1012, 1.0
    %v1036 = vadd.f32 %v1014, 1.0
    %v1037 = vadd.f32 %v1016, 1.0
    %v1038 = vadd.f32 %v1018, 1.0
    %v1039 = vadd.f32 %v1020, 1.0
    %v1040 = vadd.f32 %v1022, 1.0
    %v1041 = vadd.f32 %v1024, 1.0
    %v1042 = vadd.f32 %v1026, 1.0
    %v1043 = vrcp.pop %v1027
    %v1044 = vmul.f32 %v1027, %v1043
    %v1045 = vsub.f32 1.0, %v1044
    %v1046 = vmul.f32 %v1043, %v1045
    %v1047 = vadd.f32 %v1043, %v1046
    %vm1048 = vweird.f32 %v1027
    %vm1049 = vweird.f32 %v1043
    %vm1050 = vmor %vm1048, %vm1049
    %v1051 = vsel %vm1050, %v1043, %v1047
    %v1052 = vand.u32 2147483647, %v1027
    %vm1053 = vcmp.eq.f32.partialorder %v1052, 8.507059e+37
    %v1054 = vand.u32 %v1027, 2147483648
    %v1055 = vor.u32 1.1754944e-38, %v1054
    %v1056 = vsel %vm1053, %v1055, %v1051
    %v1057 = vmul.f32 1.0, %v1056
    %v1058 = vrcp.pop %v1028
    %v1059 = vmul.f32 %v1028, %v1058
    %v1060 = vsub.f32 1.0, %v1059
    %v1061 = vmul.f32 %v1058, %v1060
    %v1062 = vadd.f32 %v1058, %v1061
    %vm1063 = vweird.f32 %v1028
    %vm1064 = vweird.f32 %v1058
    %vm1065 = vmor %vm1063, %vm1064
    %v1066 = vsel %vm1065, %v1058, %v1062
    %v1067 = vand.u32 2147483647, %v1028
    %vm1068 = vcmp.eq.f32.partialorder %v1067, 8.507059e+37
    %v1069 = vand.u32 %v1028, 2147483648
    %v1070 = vor.u32 1.1754944e-38, %v1069
    %v1071 = vsel %vm1068, %v1070, %v1066
    %v1072 = vmul.f32 1.0, %v1071
    %v1073 = vrcp.pop %v1029
    %v1074 = vmul.f32 %v1029, %v1073
    %v1075 = vsub.f32 1.0, %v1074
    %v1076 = vmul.f32 %v1073, %v1075
    %v1077 = vadd.f32 %v1073, %v1076
    %vm1078 = vweird.f32 %v1029
    %vm1079 = vweird.f32 %v1073
    %vm1080 = vmor %vm1078, %vm1079
    %v1081 = vsel %vm1080, %v1073, %v1077
    %v1082 = vand.u32 2147483647, %v1029
    %vm1083 = vcmp.eq.f32.partialorder %v1082, 8.507059e+37
    %v1084 = vand.u32 %v1029, 2147483648
    %v1085 = vor.u32 1.1754944e-38, %v1084
    %v1086 = vsel %vm1083, %v1085, %v1081
    %v1087 = vmul.f32 1.0, %v1086
    %v1088 = vrcp.pop %v1030
    %v1089 = vmul.f32 %v1030, %v1088
    %v1090 = vsub.f32 1.0, %v1089
    %v1091 = vmul.f32 %v1088, %v1090
    %v1092 = vadd.f32 %v1088, %v1091
    %vm1093 = vweird.f32 %v1030
    %vm1094 = vweird.f32 %v1088
    %vm1095 = vmor %vm1093, %vm1094
    %v1096 = vsel %vm1095, %v1088, %v1092
    %v1097 = vand.u32 2147483647, %v1030
    %vm1098 = vcmp.eq.f32.partialorder %v1097, 8.507059e+37
    %v1099 = vand.u32 %v1030, 2147483648
    %v1100 = vor.u32 1.1754944e-38, %v1099
    %v1101 = vsel %vm1098, %v1100, %v1096
    %v1102 = vmul.f32 1.0, %v1101
    %v1103 = vrcp.pop %v1031
    %v1104 = vmul.f32 %v1031, %v1103
    %v1105 = vsub.f32 1.0, %v1104
    %v1106 = vmul.f32 %v1103, %v1105
    %v1107 = vadd.f32 %v1103, %v1106
    %vm1108 = vweird.f32 %v1031
    %vm1109 = vweird.f32 %v1103
    %vm1110 = vmor %vm1108, %vm1109
    %v1111 = vsel %vm1110, %v1103, %v1107
    %v1112 = vand.u32 2147483647, %v1031
    %vm1113 = vcmp.eq.f32.partialorder %v1112, 8.507059e+37
    %v1114 = vand.u32 %v1031, 2147483648
    %v1115 = vor.u32 1.1754944e-38, %v1114
    %v1116 = vsel %vm1113, %v1115, %v1111
    %v1117 = vmul.f32 1.0, %v1116
    %v1118 = vrcp.pop %v1032
    %v1119 = vmul.f32 %v1032, %v1118
    %v1120 = vsub.f32 1.0, %v1119
    %v1121 = vmul.f32 %v1118, %v1120
    %v1122 = vadd.f32 %v1118, %v1121
    %vm1123 = vweird.f32 %v1032
    %vm1124 = vweird.f32 %v1118
    %vm1125 = vmor %vm1123, %vm1124
    %v1126 = vsel %vm1125, %v1118, %v1122
    %v1127 = vand.u32 2147483647, %v1032
    %vm1128 = vcmp.eq.f32.partialorder %v1127, 8.507059e+37
    %v1129 = vand.u32 %v1032, 2147483648
    %v1130 = vor.u32 1.1754944e-38, %v1129
    %v1131 = vsel %vm1128, %v1130, %v1126
    %v1132 = vmul.f32 1.0, %v1131
    %v1133 = vrcp.pop %v1033
    %v1134 = vmul.f32 %v1033, %v1133
    %v1135 = vsub.f32 1.0, %v1134
    %v1136 = vmul.f32 %v1133, %v1135
    %v1137 = vadd.f32 %v1133, %v1136
    %vm1138 = vweird.f32 %v1033
    %vm1139 = vweird.f32 %v1133
    %vm1140 = vmor %vm1138, %vm1139
    %v1141 = vsel %vm1140, %v1133, %v1137
    %v1142 = vand.u32 2147483647, %v1033
    %vm1143 = vcmp.eq.f32.partialorder %v1142, 8.507059e+37
    %v1144 = vand.u32 %v1033, 2147483648
    %v1145 = vor.u32 1.1754944e-38, %v1144
    %v1146 = vsel %vm1143, %v1145, %v1141
    %v1147 = vmul.f32 1.0, %v1146
    %v1148 = vrcp.pop %v1034
    %v1149 = vmul.f32 %v1034, %v1148
    %v1150 = vsub.f32 1.0, %v1149
    %v1151 = vmul.f32 %v1148, %v1150
    %v1152 = vadd.f32 %v1148, %v1151
    %vm1153 = vweird.f32 %v1034
    %vm1154 = vweird.f32 %v1148
    %vm1155 = vmor %vm1153, %vm1154
    %v1156 = vsel %vm1155, %v1148, %v1152
    %v1157 = vand.u32 2147483647, %v1034
    %vm1158 = vcmp.eq.f32.partialorder %v1157, 8.507059e+37
    %v1159 = vand.u32 %v1034, 2147483648
    %v1160 = vor.u32 1.1754944e-38, %v1159
    %v1161 = vsel %vm1158, %v1160, %v1156
    %v1162 = vmul.f32 1.0, %v1161
    %v1163 = vrcp.pop %v1035
    %v1164 = vmul.f32 %v1035, %v1163
    %v1165 = vsub.f32 1.0, %v1164
    %v1166 = vmul.f32 %v1163, %v1165
    %v1167 = vadd.f32 %v1163, %v1166
    %vm1168 = vweird.f32 %v1035
    %vm1169 = vweird.f32 %v1163
    %vm1170 = vmor %vm1168, %vm1169
    %v1171 = vsel %vm1170, %v1163, %v1167
    %v1172 = vand.u32 2147483647, %v1035
    %vm1173 = vcmp.eq.f32.partialorder %v1172, 8.507059e+37
    %v1174 = vand.u32 %v1035, 2147483648
    %v1175 = vor.u32 1.1754944e-38, %v1174
    %v1176 = vsel %vm1173, %v1175, %v1171
    %v1177 = vmul.f32 1.0, %v1176
    %v1178 = vrcp.pop %v1036
    %v1179 = vmul.f32 %v1036, %v1178
    %v1180 = vsub.f32 1.0, %v1179
    %v1181 = vmul.f32 %v1178, %v1180
    %v1182 = vadd.f32 %v1178, %v1181
    %vm1183 = vweird.f32 %v1036
    %vm1184 = vweird.f32 %v1178
    %vm1185 = vmor %vm1183, %vm1184
    %v1186 = vsel %vm1185, %v1178, %v1182
    %v1187 = vand.u32 2147483647, %v1036
    %vm1188 = vcmp.eq.f32.partialorder %v1187, 8.507059e+37
    %v1189 = vand.u32 %v1036, 2147483648
    %v1190 = vor.u32 1.1754944e-38, %v1189
    %v1191 = vsel %vm1188, %v1190, %v1186
    %v1192 = vmul.f32 1.0, %v1191
    %v1193 = vrcp.pop %v1037
    %v1194 = vmul.f32 %v1037, %v1193
    %v1195 = vsub.f32 1.0, %v1194
    %v1196 = vmul.f32 %v1193, %v1195
    %v1197 = vadd.f32 %v1193, %v1196
    %vm1198 = vweird.f32 %v1037
    %vm1199 = vweird.f32 %v1193
    %vm1200 = vmor %vm1198, %vm1199
    %v1201 = vsel %vm1200, %v1193, %v1197
    %v1202 = vand.u32 2147483647, %v1037
    %vm1203 = vcmp.eq.f32.partialorder %v1202, 8.507059e+37
    %v1204 = vand.u32 %v1037, 2147483648
    %v1205 = vor.u32 1.1754944e-38, %v1204
    %v1206 = vsel %vm1203, %v1205, %v1201
    %v1207 = vmul.f32 1.0, %v1206
    %v1208 = vrcp.pop %v1038
    %v1209 = vmul.f32 %v1038, %v1208
    %v1210 = vsub.f32 1.0, %v1209
    %v1211 = vmul.f32 %v1208, %v1210
    %v1212 = vadd.f32 %v1208, %v1211
    %vm1213 = vweird.f32 %v1038
    %vm1214 = vweird.f32 %v1208
    %vm1215 = vmor %vm1213, %vm1214
    %v1216 = vsel %vm1215, %v1208, %v1212
    %v1217 = vand.u32 2147483647, %v1038
    %vm1218 = vcmp.eq.f32.partialorder %v1217, 8.507059e+37
    %v1219 = vand.u32 %v1038, 2147483648
    %v1220 = vor.u32 1.1754944e-38, %v1219
    %v1221 = vsel %vm1218, %v1220, %v1216
    %v1222 = vmul.f32 1.0, %v1221
    %v1223 = vrcp.pop %v1039
    %v1224 = vmul.f32 %v1039, %v1223
    %v1225 = vsub.f32 1.0, %v1224
    %v1226 = vmul.f32 %v1223, %v1225
    %v1227 = vadd.f32 %v1223, %v1226
    %vm1228 = vweird.f32 %v1039
    %vm1229 = vweird.f32 %v1223
    %vm1230 = vmor %vm1228, %vm1229
    %v1231 = vsel %vm1230, %v1223, %v1227
    %v1232 = vand.u32 2147483647, %v1039
    %vm1233 = vcmp.eq.f32.partialorder %v1232, 8.507059e+37
    %v1234 = vand.u32 %v1039, 2147483648
    %v1235 = vor.u32 1.1754944e-38, %v1234
    %v1236 = vsel %vm1233, %v1235, %v1231
    %v1237 = vmul.f32 1.0, %v1236
    %v1238 = vrcp.pop %v1040
    %v1239 = vmul.f32 %v1040, %v1238
    %v1240 = vsub.f32 1.0, %v1239
    %v1241 = vmul.f32 %v1238, %v1240
    %v1242 = vadd.f32 %v1238, %v1241
    %vm1243 = vweird.f32 %v1040
    %vm1244 = vweird.f32 %v1238
    %vm1245 = vmor %vm1243, %vm1244
    %v1246 = vsel %vm1245, %v1238, %v1242
    %v1247 = vand.u32 2147483647, %v1040
    %vm1248 = vcmp.eq.f32.partialorder %v1247, 8.507059e+37
    %v1249 = vand.u32 %v1040, 2147483648
    %v1250 = vor.u32 1.1754944e-38, %v1249
    %v1251 = vsel %vm1248, %v1250, %v1246
    %v1252 = vmul.f32 1.0, %v1251
    %v1253 = vrcp.pop %v1041
    %v1254 = vmul.f32 %v1041, %v1253
    %v1255 = vsub.f32 1.0, %v1254
    %v1256 = vmul.f32 %v1253, %v1255
    %v1257 = vadd.f32 %v1253, %v1256
    %vm1258 = vweird.f32 %v1041
    %vm1259 = vweird.f32 %v1253
    %vm1260 = vmor %vm1258, %vm1259
    %v1261 = vsel %vm1260, %v1253, %v1257
    %v1262 = vand.u32 2147483647, %v1041
    %vm1263 = vcmp.eq.f32.partialorder %v1262, 8.507059e+37
    %v1264 = vand.u32 %v1041, 2147483648
    %v1265 = vor.u32 1.1754944e-38, %v1264
    %v1266 = vsel %vm1263, %v1265, %v1261
    %v1267 = vmul.f32 1.0, %v1266
    %v1268 = vrcp.pop %v1042
    %v1269 = vmul.f32 %v1042, %v1268
    %v1270 = vsub.f32 1.0, %v1269
    %v1271 = vmul.f32 %v1268, %v1270
    %v1272 = vadd.f32 %v1268, %v1271
    %vm1273 = vweird.f32 %v1042
    %vm1274 = vweird.f32 %v1268
    %vm1275 = vmor %vm1273, %vm1274
    %v1276 = vsel %vm1275, %v1268, %v1272
    %v1277 = vand.u32 2147483647, %v1042
    %vm1278 = vcmp.eq.f32.partialorder %v1277, 8.507059e+37
    %v1279 = vand.u32 %v1042, 2147483648
    %v1280 = vor.u32 1.1754944e-38, %v1279
    %v1281 = vsel %vm1278, %v1280, %v1276
    %v1282 = vmul.f32 1.0, %v1281
    %v1283 = vpack.c.bf16 %v1072, %v1057
    %v1284 = vpack.c.bf16 %v1102, %v1087
    %v1285 = vpack.c.bf16 %v1132, %v1117
    %v1286 = vpack.c.bf16 %v1162, %v1147
    %v1287 = vpack.c.bf16 %v1192, %v1177
    %v1288 = vpack.c.bf16 %v1222, %v1207
    %v1289 = vpack.c.bf16 %v1252, %v1237
    %v1290 = vpack.c.bf16 %v1282, %v1267
    %v1291 = vld [vmem:[#allocation11] sm:$0xf]
    %v1292 = vld [vmem:[#allocation11 + $0x4] sm:$0xf]
    %v1293 = vld [vmem:[#allocation11 + $0x8] sm:$0xf]
    %v1294 = vld [vmem:[#allocation11 + $0xc] sm:$0xf]
    %v1295 = vld [vmem:[#allocation11 + $0x10] sm:$0xf]
    %v1296 = vld [vmem:[#allocation11 + $0x14] sm:$0xf]
    %v1297 = vld [vmem:[#allocation11 + $0x18] sm:$0xf]
    %v1298 = vld [vmem:[#allocation11 + $0x1c] sm:$0xf]
    %v1299 = vld [vmem:[#allocation11 + $0x20] sm:$0xf]
    %v1300 = vld [vmem:[#allocation11 + $0x24] sm:$0xf]
    %v1301 = vld [vmem:[#allocation11 + $0x28] sm:$0xf]
    %v1302 = vld [vmem:[#allocation11 + $0x2c] sm:$0xf]
    %v1303 = vld [vmem:[#allocation11 + $0x30] sm:$0xf]
    %v1304 = vld [vmem:[#allocation11 + $0x34] sm:$0xf]
    %v1305 = vld [vmem:[#allocation11 + $0x38] sm:$0xf]
    %v1306 = vld [vmem:[#allocation11 + $0x3c] sm:$0xf]
    %v1307 = vld [vmem:[%s8] sm:$0x1]
    %v1309 = vperm.slane %v1307, 0
    %v1327 = vunpack.c.l.b16 %v1291
    %v1328 = vunpack.c.l.b16 %v1292
    %v1329 = vunpack.c.l.b16 %v1293
    %v1330 = vunpack.c.l.b16 %v1294
    %v1331 = vunpack.c.l.b16 %v1295
    %v1332 = vunpack.c.l.b16 %v1296
    %v1333 = vunpack.c.l.b16 %v1297
    %v1334 = vunpack.c.l.b16 %v1298
    %v1335 = vunpack.c.l.b16 %v1299
    %v1336 = vunpack.c.l.b16 %v1300
    %v1337 = vunpack.c.l.b16 %v1301
    %v1338 = vunpack.c.l.b16 %v1302
    %v1339 = vunpack.c.l.b16 %v1303
    %v1340 = vunpack.c.l.b16 %v1304
    %v1341 = vunpack.c.l.b16 %v1305
    %v1342 = vunpack.c.l.b16 %v1306
    %v1343 = vpack.c.b16 %v1328, %v1327
    %v1344 = vpack.c.b16 %v1330, %v1329
    %v1345 = vpack.c.b16 %v1332, %v1331
    %v1346 = vpack.c.b16 %v1334, %v1333
    %v1347 = vpack.c.b16 %v1336, %v1335
    %v1348 = vpack.c.b16 %v1338, %v1337
    %v1349 = vpack.c.b16 %v1340, %v1339
    %v1350 = vpack.c.b16 %v1342, %v1341
    %1359 = vmatpush.bf16.msra.mxu0 %v1350
    %1360 = vmatpush.bf16.msra.mxu0 %v1349
    %1361 = vmatpush.bf16.msra.mxu0 %v1348
    %1362 = vmatpush.bf16.msra.mxu0 %v1347
    %1363 = vmatpush.bf16.msra.mxu0 %v1346
    %1364 = vmatpush.bf16.msra.mxu0 %v1345
    %1365 = vmatpush.bf16.msra.mxu0 %v1344
    %1366 = vmatpush.bf16.msra.mxu0 %v1343
    %1367 = vmatmul.bf16.gmra.mxu0 %v1283
    %v1368 = vpop.f32.mrf.mxu0
    %v1369 = vadd.f32 %v1309, %v1368
    %v1370 = vpop.f32.mrf.mxu0
    %v1371 = vadd.f32 %v1309, %v1370
    %1372 = vmatmul.bf16.gmra.mxu0 %v1284
    %v1373 = vpop.f32.mrf.mxu0
    %v1374 = vadd.f32 %v1309, %v1373
    %v1375 = vpop.f32.mrf.mxu0
    %v1376 = vadd.f32 %v1309, %v1375
    %1377 = vmatmul.bf16.gmra.mxu0 %v1285
    %v1378 = vpop.f32.mrf.mxu0
    %v1379 = vadd.f32 %v1309, %v1378
    %v1380 = vpop.f32.mrf.mxu0
    %v1381 = vadd.f32 %v1309, %v1380
    %1382 = vmatmul.bf16.gmra.mxu0 %v1286
    %v1383 = vpop.f32.mrf.mxu0
    %v1384 = vadd.f32 %v1309, %v1383
    %v1385 = vpop.f32.mrf.mxu0
    %v1386 = vadd.f32 %v1309, %v1385
    %1387 = vmatmul.bf16.gmra.mxu0 %v1287
    %v1388 = vpop.f32.mrf.mxu0
    %v1389 = vadd.f32 %v1309, %v1388
    %v1390 = vpop.f32.mrf.mxu0
    %v1391 = vadd.f32 %v1309, %v1390
    %1392 = vmatmul.bf16.gmra.mxu0 %v1288
    %v1393 = vpop.f32.mrf.mxu0
    %v1394 = vadd.f32 %v1309, %v1393
    %v1395 = vpop.f32.mrf.mxu0
    %v1396 = vadd.f32 %v1309, %v1395
    %1397 = vmatmul.bf16.gmra.mxu0 %v1289
    %v1398 = vpop.f32.mrf.mxu0
    %v1399 = vadd.f32 %v1309, %v1398
    %v1400 = vpop.f32.mrf.mxu0
    %v1401 = vadd.f32 %v1309, %v1400
    %1402 = vmatmul.bf16.gmra.mxu0 %v1290
    %v1403 = vpop.f32.mrf.mxu0
    %v1404 = vadd.f32 %v1309, %v1403
    %v1405 = vpop.f32.mrf.mxu0
    %v1406 = vadd.f32 %v1309, %v1405
    %1407 = vdwg.mxu0
    %1408 = vst [vmem:[#allocation13] sm:$0xff] %v1369
    %1409 = vst [vmem:[#allocation13 + $0x8] sm:$0xff] %v1371
    %1410 = vst [vmem:[#allocation13 + $0x10] sm:$0xff] %v1374
    %1411 = vst [vmem:[#allocation13 + $0x18] sm:$0xff] %v1376
    %1412 = vst [vmem:[#allocation13 + $0x20] sm:$0xff] %v1379
    %1413 = vst [vmem:[#allocation13 + $0x28] sm:$0xff] %v1381
    %1414 = vst [vmem:[#allocation13 + $0x30] sm:$0xff] %v1384
    %1415 = vst [vmem:[#allocation13 + $0x38] sm:$0xff] %v1386
    %1416 = vst [vmem:[#allocation13 + $0x40] sm:$0xff] %v1389
    %1417 = vst [vmem:[#allocation13 + $0x48] sm:$0xff] %v1391
    %1418 = vst [vmem:[#allocation13 + $0x50] sm:$0xff] %v1394
    %1419 = vst [vmem:[#allocation13 + $0x58] sm:$0xff] %v1396
    %1420 = vst [vmem:[#allocation13 + $0x60] sm:$0xff] %v1399
    %1421 = vst [vmem:[#allocation13 + $0x68] sm:$0xff] %v1401
    %1422 = vst [vmem:[#allocation13 + $0x70] sm:$0xff] %v1404
    %1423 = vst [vmem:[#allocation13 + $0x78] sm:$0xff] %v1406
    // Predicated region
    $region62: #{tpu_custom_call.1} parent=1 // pred_check
      _
    $region63: #{tpu_custom_call.1} parent=1 // pred_check_branch
      %1425 = sbr.rel (0) target = $region65
    $region64: #{tpu_custom_call.1} parent=1 // pred_region
      %1427 = vsyncadd [#allocation4], 0
      %s1428 = sshll.u32 [#allocation13], 4
      %s1429 = int_to_ptr.vmem [resolvable:$true] %s1428
      %s1430 = sshll.u32 %s9, 4
      %s1431 = int_to_ptr.hbm [resolvable:$true] %s1430
      %1436 = dma.vmem_to_hbm [thread:$0]  %s1429, 2048, %s1431, [#allocation4], 128, 128, 8
    $region65: #{tpu_custom_call.1} parent=1 // pred_fallthru
      _
    // Predicated region
    $region66: #{tpu_custom_call.1} parent=1 // pred_check
      _
    $region67: #{tpu_custom_call.1} parent=1 // pred_check_branch
      %1438 = sbr.rel (0) target = $region69
    $region68: #{tpu_custom_call.1} parent=1 // pred_region
      %1440 = dma.done [#allocation4], 2048
    $region69: #{tpu_custom_call.1} parent=1 // pred_fallthru
      _
    %1441 = vsyncpa [#allocation3], 1
    %1442 = vsyncpa [#allocation6], 1
    %1443 = vsyncpa [#allocation9], 1
    %1444 = vsyncpa [#allocation12], 1
    %1445 = vsyncpa [#allocation4], 1

</llo_original>
